<compile_context>
chip_gen: v7x
topology: tpu7x:2x2x1
jax: 0.10.0
libtpu: 0.0.40
codegen_flags: <defaults>
</compile_context>

<pallas_src>
import jax
import jax.numpy as jnp
from jax.experimental import pallas as pl
from jax.experimental.pallas import tpu as pltpu


def dwconv_kernel(x_ref, w_ref, b_ref, o_ref, xp_ref):
    # x_ref : (1, H, W, CB)   VMEM  input tile (NHWC, channel block on lanes)
    # w_ref : (9, CB)         VMEM  flattened 3x3 taps for this channel block
    # b_ref : (1, CB)         VMEM  bias for this channel block
    # o_ref : (1, H, W, CB)   VMEM  output tile
    # xp_ref: (H+2, W+2, CB)  VMEM  f32 scratch holding the zero-halo'd input
    H = o_ref.shape[1]
    W = o_ref.shape[2]
    CB = o_ref.shape[3]

    # Build the zero halo in VMEM (no padded copy of the input ever hits HBM);
    # cast to f32 once here instead of once per tap.
    xp_ref[...] = jnp.zeros_like(xp_ref)
    xp_ref[1:H + 1, 1:W + 1, :] = x_ref[0].astype(jnp.float32)

    acc = jnp.zeros((H, W, CB), jnp.float32)
    # 3x3 depthwise conv: 9 row/sublane-shifted slices, each scaled by a
    # per-channel (lane-broadcast) tap. Channels are the lane dim, so no
    # cross-lane shifts are needed.
    for kh in range(3):
        for kw in range(3):
            tap = w_ref[kh * 3 + kw, :]                        # (CB,)
            acc = acc + xp_ref[kh:kh + H, kw:kw + W, :] * tap

    o_ref[0] = (acc + b_ref[0, :]).astype(o_ref.dtype)


def dwconv(x, w, b):
    """Depthwise conv2d, 3x3, stride 1, pad 1, groups=C, with bias.

    x: (N, C, H, W)
    w: (C, 1, 3, 3)  (PyTorch depthwise weight layout)
    b: (C,)
    Returns (N, C, H, W), same dtype as x.
    """
    N, C, H, W = x.shape

    # Channel block: the full C when it is small (block dim == full dim is
    # allowed), otherwise 128 lanes with C padded up to a multiple of 128.
    if C >= 128:
        CB = 128
        C_pad = ((C + 127) // 128) * 128
    else:
        CB = C
        C_pad = C

    # NCHW -> NHWC so channels sit on the 128-lane axis.
    x_t = jnp.transpose(x, (0, 2, 3, 1))                       # (N, H, W, C)
    w_t = jnp.transpose(w.reshape(C, 9), (1, 0))               # (9, C)
    b_t = b.reshape(1, C)                                      # (1, C)
    if C_pad != C:
        x_t = jnp.pad(x_t, ((0, 0), (0, 0), (0, 0), (0, C_pad - C)))
        w_t = jnp.pad(w_t, ((0, 0), (0, C_pad - C)))
        b_t = jnp.pad(b_t, ((0, 0), (0, C_pad - C)))

    out = pl.pallas_call(
        dwconv_kernel,
        out_shape=jax.ShapeDtypeStruct((N, H, W, C_pad), x.dtype),
        grid=(N, C_pad // CB),
        in_specs=[
            pl.BlockSpec((1, H, W, CB), lambda n, cb: (n, 0, 0, cb)),
            pl.BlockSpec((9, CB), lambda n, cb: (0, cb)),
            pl.BlockSpec((1, CB), lambda n, cb: (0, cb)),
        ],
        out_specs=pl.BlockSpec((1, H, W, CB), lambda n, cb: (n, 0, 0, cb)),
        scratch_shapes=[pltpu.VMEM((H + 2, W + 2, CB), jnp.float32)],
        compiler_params=pltpu.CompilerParams(
            # Every (n, channel-block) tile is independent — no reduction axis.
            dimension_semantics=("parallel", "parallel"),
            # Headroom for larger blocks; stays within v7x's 64 MiB VMEM.
            vmem_limit_bytes=48 * 1024 * 1024,
        ),
    )(x_t, w_t, b_t)

    if C_pad != C:
        out = out[..., :C]
    return jnp.transpose(out, (0, 3, 1, 2))                    # back to NCHW


if __name__ == "__main__":
    # Small, deterministic example consistent with the module (dim = channels).
    N, C, H, W = 2, 4, 16, 16
    key = jax.random.PRNGKey(0)
    kx, kw, kb = jax.random.split(key, 3)

    x = jax.random.normal(kx, (N, C, H, W), dtype=jnp.float32)
    # Deterministic in-script parameter init (shapes from nn.Conv2d(dim, dim, 3, groups=dim)).
    weight = jax.random.normal(kw, (C, 1, 3, 3), dtype=jnp.float32) * 0.1
    bias = jax.random.normal(kb, (C,), dtype=jnp.float32) * 0.1

    out = dwconv(x, weight, bias)
    out = jax.block_until_ready(out)

    # Reference: XLA grouped conv (same semantics as torch.nn.Conv2d groups=C).
    ref = jax.lax.conv_general_dilated(
        x, weight,
        window_strides=(1, 1), padding="SAME",
        dimension_numbers=("NCHW", "OIHW", "NCHW"),
        feature_group_count=C,
    ) + bias.reshape(1, C, 1, 1)

    assert out.shape == (N, C, H, W)
    assert jnp.allclose(out, ref, atol=1e-5, rtol=1e-5)
    print("KERNEL_OK")
</pallas_src>

<mosaic_0001>
module attributes {stable_mosaic.version = 11 : i64} {
  func.func @dwconv_kernel(%arg0: i32, %arg1: i32, %arg2: memref<1x16x16x4xf32, #tpu.memory_space<vmem>>, %arg3: memref<9x4xf32, #tpu.memory_space<vmem>>, %arg4: memref<1x4xf32, #tpu.memory_space<vmem>>, %arg5: memref<1x16x16x4xf32, #tpu.memory_space<vmem>>, %arg6: memref<18x18x4xf32, #tpu.memory_space<vmem>>) attributes {dimension_semantics = [#tpu.dimension_semantics<parallel>, #tpu.dimension_semantics<parallel>], iteration_bounds = array<i64: 2, 1>, scalar_prefetch = 0 : i64, scratch_operands = 1 : i64, tpu.core_type = #tpu.core_type<tc>, window_params = [{transform_indices = @transform_0, window_bounds = array<i64: 1, 16, 16, 4>}, {transform_indices = @transform_1, window_bounds = array<i64: 9, 4>}, {transform_indices = @transform_2, window_bounds = array<i64: 1, 4>}, {transform_indices = @transform_3, window_bounds = array<i64: 1, 16, 16, 4>}]} {
    %cst = arith.constant 0.000000e+00 : f32
    %0 = vector.broadcast %cst : f32 to vector<18x18x4xf32>
    %c0 = arith.constant 0 : index
    %c0_0 = arith.constant 0 : index
    %c0_1 = arith.constant 0 : index
    %1 = vector.load %arg6[%c0, %c0_0, %c0_1] : memref<18x18x4xf32, #tpu.memory_space<vmem>>, vector<18x18x4xf32>
    tpu.vector_store %arg6[%c0, %c0_0, %c0_1], %0 {strides = array<i32>} : memref<18x18x4xf32, #tpu.memory_space<vmem>>, vector<18x18x4xf32>,
    %c0_2 = arith.constant 0 : index
    %c0_3 = arith.constant 0 : index
    %c0_4 = arith.constant 0 : index
    %c0_5 = arith.constant 0 : index
    %2 = vector.load %arg2[%c0_2, %c0_3, %c0_4, %c0_5] : memref<1x16x16x4xf32, #tpu.memory_space<vmem>>, vector<1x16x16x4xf32>
    %3 = vector.shape_cast %2 : vector<1x16x16x4xf32> to vector<16x16x4xf32>
    %c1 = arith.constant 1 : index
    %c1_6 = arith.constant 1 : index
    %c0_7 = arith.constant 0 : index
    %4 = vector.load %arg6[%c1, %c1_6, %c0_7] : memref<18x18x4xf32, #tpu.memory_space<vmem>>, vector<16x16x4xf32>
    tpu.vector_store %arg6[%c1, %c1_6, %c0_7], %3 {strides = array<i32>} : memref<18x18x4xf32, #tpu.memory_space<vmem>>, vector<16x16x4xf32>,
    %cst_8 = arith.constant 0.000000e+00 : f32
    %5 = vector.broadcast %cst_8 : f32 to vector<16x16x4xf32>
    %c0_9 = arith.constant 0 : index
    %c0_10 = arith.constant 0 : index
    %6 = vector.load %arg3[%c0_9, %c0_10] : memref<9x4xf32, #tpu.memory_space<vmem>>, vector<1x4xf32>
    %7 = vector.shape_cast %6 : vector<1x4xf32> to vector<4xf32>
    %c0_11 = arith.constant 0 : index
    %c0_12 = arith.constant 0 : index
    %c0_13 = arith.constant 0 : index
    %8 = vector.load %arg6[%c0_11, %c0_12, %c0_13] : memref<18x18x4xf32, #tpu.memory_space<vmem>>, vector<16x16x4xf32>
    %9 = vector.shape_cast %7 : vector<4xf32> to vector<1x1x4xf32>
    %10 = vector.broadcast %9 : vector<1x1x4xf32> to vector<16x16x4xf32>
    %11 = arith.mulf %8, %10 : vector<16x16x4xf32>
    %12 = arith.addf %5, %11 : vector<16x16x4xf32>
    %c1_14 = arith.constant 1 : index
    %c0_15 = arith.constant 0 : index
    %13 = vector.load %arg3[%c1_14, %c0_15] : memref<9x4xf32, #tpu.memory_space<vmem>>, vector<1x4xf32>
    %14 = vector.shape_cast %13 : vector<1x4xf32> to vector<4xf32>
    %c0_16 = arith.constant 0 : index
    %c1_17 = arith.constant 1 : index
    %c0_18 = arith.constant 0 : index
    %15 = vector.load %arg6[%c0_16, %c1_17, %c0_18] : memref<18x18x4xf32, #tpu.memory_space<vmem>>, vector<16x16x4xf32>
    %16 = vector.shape_cast %14 : vector<4xf32> to vector<1x1x4xf32>
    %17 = vector.broadcast %16 : vector<1x1x4xf32> to vector<16x16x4xf32>
    %18 = arith.mulf %15, %17 : vector<16x16x4xf32>
    %19 = arith.addf %12, %18 : vector<16x16x4xf32>
    %c2 = arith.constant 2 : index
    %c0_19 = arith.constant 0 : index
    %20 = vector.load %arg3[%c2, %c0_19] : memref<9x4xf32, #tpu.memory_space<vmem>>, vector<1x4xf32>
    %21 = vector.shape_cast %20 : vector<1x4xf32> to vector<4xf32>
    %c0_20 = arith.constant 0 : index
    %c2_21 = arith.constant 2 : index
    %c0_22 = arith.constant 0 : index
    %22 = vector.load %arg6[%c0_20, %c2_21, %c0_22] : memref<18x18x4xf32, #tpu.memory_space<vmem>>, vector<16x16x4xf32>
    %23 = vector.shape_cast %21 : vector<4xf32> to vector<1x1x4xf32>
    %24 = vector.broadcast %23 : vector<1x1x4xf32> to vector<16x16x4xf32>
    %25 = arith.mulf %22, %24 : vector<16x16x4xf32>
    %26 = arith.addf %19, %25 : vector<16x16x4xf32>
    %c3 = arith.constant 3 : index
    %c0_23 = arith.constant 0 : index
    %27 = vector.load %arg3[%c3, %c0_23] : memref<9x4xf32, #tpu.memory_space<vmem>>, vector<1x4xf32>
    %28 = vector.shape_cast %27 : vector<1x4xf32> to vector<4xf32>
    %c1_24 = arith.constant 1 : index
    %c0_25 = arith.constant 0 : index
    %c0_26 = arith.constant 0 : index
    %29 = vector.load %arg6[%c1_24, %c0_25, %c0_26] : memref<18x18x4xf32, #tpu.memory_space<vmem>>, vector<16x16x4xf32>
    %30 = vector.shape_cast %28 : vector<4xf32> to vector<1x1x4xf32>
    %31 = vector.broadcast %30 : vector<1x1x4xf32> to vector<16x16x4xf32>
    %32 = arith.mulf %29, %31 : vector<16x16x4xf32>
    %33 = arith.addf %26, %32 : vector<16x16x4xf32>
    %c4 = arith.constant 4 : index
    %c0_27 = arith.constant 0 : index
    %34 = vector.load %arg3[%c4, %c0_27] : memref<9x4xf32, #tpu.memory_space<vmem>>, vector<1x4xf32>
    %35 = vector.shape_cast %34 : vector<1x4xf32> to vector<4xf32>
    %c1_28 = arith.constant 1 : index
    %c1_29 = arith.constant 1 : index
    %c0_30 = arith.constant 0 : index
    %36 = vector.load %arg6[%c1_28, %c1_29, %c0_30] : memref<18x18x4xf32, #tpu.memory_space<vmem>>, vector<16x16x4xf32>
    %37 = vector.shape_cast %35 : vector<4xf32> to vector<1x1x4xf32>
    %38 = vector.broadcast %37 : vector<1x1x4xf32> to vector<16x16x4xf32>
    %39 = arith.mulf %36, %38 : vector<16x16x4xf32>
    %40 = arith.addf %33, %39 : vector<16x16x4xf32>
    %c5 = arith.constant 5 : index
    %c0_31 = arith.constant 0 : index
    %41 = vector.load %arg3[%c5, %c0_31] : memref<9x4xf32, #tpu.memory_space<vmem>>, vector<1x4xf32>
    %42 = vector.shape_cast %41 : vector<1x4xf32> to vector<4xf32>
    %c1_32 = arith.constant 1 : index
    %c2_33 = arith.constant 2 : index
    %c0_34 = arith.constant 0 : index
    %43 = vector.load %arg6[%c1_32, %c2_33, %c0_34] : memref<18x18x4xf32, #tpu.memory_space<vmem>>, vector<16x16x4xf32>
    %44 = vector.shape_cast %42 : vector<4xf32> to vector<1x1x4xf32>
    %45 = vector.broadcast %44 : vector<1x1x4xf32> to vector<16x16x4xf32>
    %46 = arith.mulf %43, %45 : vector<16x16x4xf32>
    %47 = arith.addf %40, %46 : vector<16x16x4xf32>
    %c6 = arith.constant 6 : index
    %c0_35 = arith.constant 0 : index
    %48 = vector.load %arg3[%c6, %c0_35] : memref<9x4xf32, #tpu.memory_space<vmem>>, vector<1x4xf32>
    %49 = vector.shape_cast %48 : vector<1x4xf32> to vector<4xf32>
    %c2_36 = arith.constant 2 : index
    %c0_37 = arith.constant 0 : index
    %c0_38 = arith.constant 0 : index
    %50 = vector.load %arg6[%c2_36, %c0_37, %c0_38] : memref<18x18x4xf32, #tpu.memory_space<vmem>>, vector<16x16x4xf32>
    %51 = vector.shape_cast %49 : vector<4xf32> to vector<1x1x4xf32>
    %52 = vector.broadcast %51 : vector<1x1x4xf32> to vector<16x16x4xf32>
    %53 = arith.mulf %50, %52 : vector<16x16x4xf32>
    %54 = arith.addf %47, %53 : vector<16x16x4xf32>
    %c7 = arith.constant 7 : index
    %c0_39 = arith.constant 0 : index
    %55 = vector.load %arg3[%c7, %c0_39] : memref<9x4xf32, #tpu.memory_space<vmem>>, vector<1x4xf32>
    %56 = vector.shape_cast %55 : vector<1x4xf32> to vector<4xf32>
    %c2_40 = arith.constant 2 : index
    %c1_41 = arith.constant 1 : index
    %c0_42 = arith.constant 0 : index
    %57 = vector.load %arg6[%c2_40, %c1_41, %c0_42] : memref<18x18x4xf32, #tpu.memory_space<vmem>>, vector<16x16x4xf32>
    %58 = vector.shape_cast %56 : vector<4xf32> to vector<1x1x4xf32>
    %59 = vector.broadcast %58 : vector<1x1x4xf32> to vector<16x16x4xf32>
    %60 = arith.mulf %57, %59 : vector<16x16x4xf32>
    %61 = arith.addf %54, %60 : vector<16x16x4xf32>
    %c8 = arith.constant 8 : index
    %c0_43 = arith.constant 0 : index
    %62 = vector.load %arg3[%c8, %c0_43] : memref<9x4xf32, #tpu.memory_space<vmem>>, vector<1x4xf32>
    %63 = vector.shape_cast %62 : vector<1x4xf32> to vector<4xf32>
    %c2_44 = arith.constant 2 : index
    %c2_45 = arith.constant 2 : index
    %c0_46 = arith.constant 0 : index
    %64 = vector.load %arg6[%c2_44, %c2_45, %c0_46] : memref<18x18x4xf32, #tpu.memory_space<vmem>>, vector<16x16x4xf32>
    %65 = vector.shape_cast %63 : vector<4xf32> to vector<1x1x4xf32>
    %66 = vector.broadcast %65 : vector<1x1x4xf32> to vector<16x16x4xf32>
    %67 = arith.mulf %64, %66 : vector<16x16x4xf32>
    %68 = arith.addf %61, %67 : vector<16x16x4xf32>
    %c0_47 = arith.constant 0 : index
    %c0_48 = arith.constant 0 : index
    %69 = vector.load %arg4[%c0_47, %c0_48] : memref<1x4xf32, #tpu.memory_space<vmem>>, vector<1x4xf32>
    %70 = vector.shape_cast %69 : vector<1x4xf32> to vector<4xf32>
    %71 = vector.shape_cast %70 : vector<4xf32> to vector<1x1x4xf32>
    %72 = vector.broadcast %71 : vector<1x1x4xf32> to vector<16x16x4xf32>
    %73 = arith.addf %68, %72 : vector<16x16x4xf32>
    %c0_49 = arith.constant 0 : index
    %c0_50 = arith.constant 0 : index
    %c0_51 = arith.constant 0 : index
    %c0_52 = arith.constant 0 : index
    %74 = vector.load %arg5[%c0_49, %c0_50, %c0_51, %c0_52] : memref<1x16x16x4xf32, #tpu.memory_space<vmem>>, vector<1x16x16x4xf32>
    %75 = vector.shape_cast %74 : vector<1x16x16x4xf32> to vector<16x16x4xf32>
    %76 = vector.shape_cast %73 : vector<16x16x4xf32> to vector<1x16x16x4xf32>
    tpu.vector_store %arg5[%c0_49, %c0_50, %c0_51, %c0_52], %76 {strides = array<i32>} : memref<1x16x16x4xf32, #tpu.memory_space<vmem>>, vector<1x16x16x4xf32>,
    return
  }
  func.func @transform_0(%arg0: i32, %arg1: i32) -> (i32, i32, i32, i32) {
    %c0_i32 = arith.constant 0 : i32
    %c0_i32_0 = arith.constant 0 : i32
    %c0_i32_1 = arith.constant 0 : i32
    return %arg0, %c0_i32, %c0_i32_0, %arg1 : i32, i32, i32, i32
  }
  func.func @transform_1(%arg0: i32, %arg1: i32) -> (i32, i32) {
    %c0_i32 = arith.constant 0 : i32
    %c0_i32_0 = arith.constant 0 : i32
    return %c0_i32, %arg1 : i32, i32
  }
  func.func @transform_2(%arg0: i32, %arg1: i32) -> (i32, i32) {
    %c0_i32 = arith.constant 0 : i32
    %c0_i32_0 = arith.constant 0 : i32
    return %c0_i32, %arg1 : i32, i32
  }
  func.func @transform_3(%arg0: i32, %arg1: i32) -> (i32, i32, i32, i32) {
    %c0_i32 = arith.constant 0 : i32
    %c0_i32_0 = arith.constant 0 : i32
    %c0_i32_1 = arith.constant 0 : i32
    return %arg0, %c0_i32, %c0_i32_0, %arg1 : i32, i32, i32, i32
  }
}

</mosaic_0001>

<llo_original>
// kernel: tpu_custom_call.1
$region0: #{tpu_custom_call.1}
  #allocation0 [shape = 'u32[]', space=smem, size = 0x4, offset = 0x4, fixed_abs, tag = 'smem constant byte address 0x4 - core index']
  #allocation1 [shape = 'u32[144,128]{1,0:T(1,128)}', space=vmem, size = 0x12000, scoped, tag = 'internal scratch']
  #allocation2 [shape = 'f32[18,18,4]{2,1,0:T(8,128)}', space=vmem, size = 0x36000, scoped, tag = 'scratch operand']
  %s0 = inlined_call_operand.vmem [shape: f32[2,16,16,4], index: 0, kind: input, shape index: {}]
  %s1 = inlined_call_operand.vmem [shape: f32[9,4], index: 1, kind: input, shape index: {}]
  %s2 = inlined_call_operand.vmem [shape: f32[1,4], index: 2, kind: input, shape index: {}]
  %s3 = inlined_call_operand.vmem [shape: f32[2,16,16,4], index: 3, kind: output, shape index: {}]
  %s4 = sld [smem:[#allocation0]]
  $region45: #{tpu_custom_call.1} parent=0
    _
  %s6 = ssub.s32 1, %s4
  %s7 = scalar_select 0, %s6, %s4
  loop: start=0, step=1, limit=4
  $region2: #{tpu_custom_call.1} parent=0 // loop_pre_header
    _
  $region3: #{tpu_custom_call.1} parent=0 // loop_header
    %s9 = sphi 0, %s13
    %p10 = scmp.ge.s32.totalorder %s9, 4
    %s16 = sphi 0, %s28
    %s17 = sphi 0, %s24
    %s18 = sphi 0, %s16
    %s19 = sphi 0, %s17
    %s20 = sphi 0, %s18
    %s21 = sphi 0, %s19
    %s33 = sphi 0, %s35
    %s36 = sphi 0, %s33
    %s37 = sphi 0, %s36
    %s53 = sphi 0, %s37
    %s59 = sphi 0, %s61
    %s62 = sphi 0, %s59
    %s63 = sphi 0, %s62
    %s79 = sphi 0, %s63
    %s85 = sphi 0, %s87
    %s88 = sphi 0, %s85
    %s89 = sphi 0, %s88
    %s105 = sphi 0, %s89
    %s113 = sphi 0, %s115
    %s116 = sphi 0, %s113
    %s117 = sphi 0, %s116
    %s133 = sphi 0, %s117
  $region4: #{tpu_custom_call.1} parent=0 // loop_header_branch
    %12 = sbr.rel (%p10) target = $region8
  $region5: #{tpu_custom_call.1} parent=0 // loop_body
    %s14 = ssub.s32 %s9, 1
    %s15 = ssub.s32 %s9, 2
    %s22 = sadd.s32 1, %s17
    %p23 = scmp.ge.s32.totalorder %s22, 1
    %s24 = scalar_select %p23, 0, %s22
    %s25 = sadd.s32 1, %s16
    %s26 = scalar_select %p23, %s25, %s16
    %p27 = scmp.ge.s32.totalorder %s26, 2
    %s28 = scalar_select %p27, 0, %s26
    %s29 = ssub.s32 %s16, %s28
    %s30 = ssub.s32 %s17, %s24
    %s31 = sor.u32 %s29, %s30
    %p32 = scmp.eq.s32.totalorder %s31, 0
    %s34 = sadd.s32 %s33, 1
    %s35 = scalar_select %p32, %s33, %s34
    %p38 = pneg %p32
    %p39 = scmp.eq.s32.totalorder %s9, 1
    %p40 = por %p38, %p39
    %p41 = scmp.ne.s32.totalorder %s33, %s36
    %p42 = scmp.eq.s32.totalorder %s9, 0
    %p43 = por %p41, %p42
    %p44 = scmp.ne.s32.totalorder %s33, %s36
    %p45 = scmp.eq.s32.totalorder %s14, 1
    %p46 = por %p44, %p45
    %p47 = scmp.ne.s32.totalorder %s36, %s37
    %p48 = scmp.eq.s32.totalorder %s14, 0
    %p49 = por %p47, %p48
    %p50 = scmp.ne.s32.totalorder %s36, %s37
    %p51 = scmp.eq.s32.totalorder %s15, 1
    %p52 = por %p50, %p51
    %p54 = scmp.ne.s32.totalorder %s37, %s53
    %p55 = scmp.eq.s32.totalorder %s15, 0
    %p56 = por %p54, %p55
    %s57 = ssub.s32 %s17, %s24
    %p58 = scmp.eq.s32.totalorder %s57, 0
    %s60 = sadd.s32 %s59, 1
    %s61 = scalar_select %p58, %s59, %s60
    %p64 = pneg %p58
    %p65 = scmp.eq.s32.totalorder %s9, 1
    %p66 = por %p64, %p65
    %p67 = scmp.ne.s32.totalorder %s59, %s62
    %p68 = scmp.eq.s32.totalorder %s9, 0
    %p69 = por %p67, %p68
    %p70 = scmp.ne.s32.totalorder %s59, %s62
    %p71 = scmp.eq.s32.totalorder %s14, 1
    %p72 = por %p70, %p71
    %p73 = scmp.ne.s32.totalorder %s62, %s63
    %p74 = scmp.eq.s32.totalorder %s14, 0
    %p75 = por %p73, %p74
    %p76 = scmp.ne.s32.totalorder %s62, %s63
    %p77 = scmp.eq.s32.totalorder %s15, 1
    %p78 = por %p76, %p77
    %p80 = scmp.ne.s32.totalorder %s63, %s79
    %p81 = scmp.eq.s32.totalorder %s15, 0
    %p82 = por %p80, %p81
    %s83 = ssub.s32 %s17, %s24
    %p84 = scmp.eq.s32.totalorder %s83, 0
    %s86 = sadd.s32 %s85, 1
    %s87 = scalar_select %p84, %s85, %s86
    %p90 = pneg %p84
    %p91 = scmp.eq.s32.totalorder %s9, 1
    %p92 = por %p90, %p91
    %p93 = scmp.ne.s32.totalorder %s85, %s88
    %p94 = scmp.eq.s32.totalorder %s9, 0
    %p95 = por %p93, %p94
    %p96 = scmp.ne.s32.totalorder %s85, %s88
    %p97 = scmp.eq.s32.totalorder %s14, 1
    %p98 = por %p96, %p97
    %p99 = scmp.ne.s32.totalorder %s88, %s89
    %p100 = scmp.eq.s32.totalorder %s14, 0
    %p101 = por %p99, %p100
    %p102 = scmp.ne.s32.totalorder %s88, %s89
    %p103 = scmp.eq.s32.totalorder %s15, 1
    %p104 = por %p102, %p103
    %p106 = scmp.ne.s32.totalorder %s89, %s105
    %p107 = scmp.eq.s32.totalorder %s15, 0
    %p108 = por %p106, %p107
    %s109 = ssub.s32 %s16, %s28
    %s110 = ssub.s32 %s17, %s24
    %s111 = sor.u32 %s109, %s110
    %p112 = scmp.eq.s32.totalorder %s111, 0
    %s114 = sadd.s32 %s113, 1
    %s115 = scalar_select %p112, %s113, %s114
    %p118 = pneg %p112
    %p119 = scmp.eq.s32.totalorder %s9, 1
    %p120 = por %p118, %p119
    %p121 = scmp.ne.s32.totalorder %s113, %s116
    %p122 = scmp.eq.s32.totalorder %s9, 0
    %p123 = por %p121, %p122
    %p124 = scmp.ne.s32.totalorder %s113, %s116
    %p125 = scmp.eq.s32.totalorder %s14, 1
    %p126 = por %p124, %p125
    %p127 = scmp.ne.s32.totalorder %s116, %s117
    %p128 = scmp.eq.s32.totalorder %s14, 0
    %p129 = por %p127, %p128
    %p130 = scmp.ne.s32.totalorder %s116, %s117
    %p131 = scmp.eq.s32.totalorder %s15, 1
    %p132 = por %p130, %p131
    %p134 = scmp.ne.s32.totalorder %s117, %s133
    %p135 = scmp.eq.s32.totalorder %s15, 0
    %p136 = por %p134, %p135
    %p137 = scmp.le.s32.totalorder 1, %s9
    %p138 = scmp.lt.s32.totalorder %s9, 3
    %p139 = pnand %p137, %p138
    %p140 = pneg %p139
    // Predicated region
    $region9: #{tpu_custom_call.1} parent=5 // pred_check
      _
    $region10: #{tpu_custom_call.1} parent=5 // pred_check_branch
      %142 = sbr.rel (%p139) target = $region12
    $region11: #{tpu_custom_call.1} parent=5 // pred_region
      %s143 = ssub.s32 %s9, 1
      // Predicated region
      $region13: #{tpu_custom_call.1} parent=11 // pred_check
        %p144 = pneg %p75
      $region14: #{tpu_custom_call.1} parent=11 // pred_check_branch
        %146 = sbr.rel (%p144) target = $region16
      $region15: #{tpu_custom_call.1} parent=11 // pred_region
        %p147 = scmp.lt.s32.totalorder %s19, 0
        %s148 = scalar_select %p147, %s19, 0
        %s149 = smul.addr %s148, 8
        %s150 = scalar_lea.vmem %s1, %s149
      $region16: #{tpu_custom_call.1} parent=11 // pred_fallthru
        _
      // Predicated region
      $region17: #{tpu_custom_call.1} parent=11 // pred_check
        %p151 = pneg %p101
      $region18: #{tpu_custom_call.1} parent=11 // pred_check_branch
        %153 = sbr.rel (%p151) target = $region20
      $region19: #{tpu_custom_call.1} parent=11 // pred_region
        %p154 = scmp.lt.s32.totalorder %s19, 0
        %s155 = scalar_select %p154, %s19, 0
        %s156 = scalar_lea.vmem %s2, %s155
      $region20: #{tpu_custom_call.1} parent=11 // pred_fallthru
        _
    $region12: #{tpu_custom_call.1} parent=5 // pred_fallthru
      _
    %p157 = scmp.lt.s32.totalorder %s9, 2
    // Predicated region
    $region21: #{tpu_custom_call.1} parent=5 // pred_check
      %p158 = pneg %p157
    $region22: #{tpu_custom_call.1} parent=5 // pred_check_branch
      %160 = sbr.rel (%p158) target = $region24
    $region23: #{tpu_custom_call.1} parent=5 // pred_region
      // Predicated region
      $region25: #{tpu_custom_call.1} parent=23 // pred_check
        %p161 = pneg %p43
      $region26: #{tpu_custom_call.1} parent=23 // pred_check_branch
        %163 = sbr.rel (%p161) target = $region28
      $region27: #{tpu_custom_call.1} parent=23 // pred_region
        %p164 = scmp.lt.s32.totalorder %s16, 1
        %s165 = scalar_select %p164, %s16, 1
        %p166 = scmp.lt.s32.totalorder %s17, 0
        %s167 = scalar_select %p166, %s17, 0
        %s168 = smul.addr %s165, 32
        %s169 = sadd.s32 %s167, %s168
        %s170 = smul.addr %s169, 8
        %s171 = scalar_lea.vmem %s0, %s170
      $region28: #{tpu_custom_call.1} parent=23 // pred_fallthru
        _
    $region24: #{tpu_custom_call.1} parent=5 // pred_fallthru
      _
    %p172 = scmp.le.s32.totalorder 1, %s9
    %p173 = scmp.lt.s32.totalorder %s9, 3
    %p174 = pnand %p172, %p173
    %p175 = pneg %p174
    // Predicated region
    $region29: #{tpu_custom_call.1} parent=5 // pred_check
      _
    $region30: #{tpu_custom_call.1} parent=5 // pred_check_branch
      %177 = sbr.rel (%p174) target = $region32
    $region31: #{tpu_custom_call.1} parent=5 // pred_region
      %s178 = ssub.s32 %s9, 1
      %p179 = scmp.lt.s32.totalorder %s18, 1
      %s180 = scalar_select %p179, %s18, 1
      %p181 = scmp.lt.s32.totalorder %s19, 0
      %s182 = scalar_select %p181, %s19, 0
      %s183 = smul.addr %s180, 32
      %s184 = sadd.s32 %s182, %s183
      %s185 = smul.addr %s184, 8
      %s186 = scalar_lea.vmem %s0, %s185
      %p187 = pneg %p49
      %p188 = pneg %p46
      %p189 = scmp.lt.s32.totalorder %s19, 0
      %s190 = scalar_select %p189, %s19, 0
      %s191 = smul.addr %s190, 8
      %s192 = scalar_lea.vmem %s1, %s191
      %p193 = pneg %p75
      %p194 = pneg %p72
      %p195 = scmp.lt.s32.totalorder %s19, 0
      %s196 = scalar_select %p195, %s19, 0
      %s197 = scalar_lea.vmem %s2, %s196
      %p198 = pneg %p101
      %p199 = pneg %p98
      %p200 = pneg %p129
      %p201 = pneg %p126
      %p202 = scmp.lt.s32.totalorder %s18, 1
      %s203 = scalar_select %p202, %s18, 1
      %p204 = scmp.lt.s32.totalorder %s19, 0
      %s205 = scalar_select %p204, %s19, 0
      %s206 = smul.addr %s203, 32
      %s207 = sadd.s32 %s205, %s206
      %s208 = smul.addr %s207, 8
      %s209 = scalar_lea.vmem %s3, %s208
      %p210 = scmp.lt.s32.totalorder %s18, 1
      %s211 = scalar_select %p210, %s18, 1
      %p212 = scmp.lt.s32.totalorder %s19, 0
      %s213 = scalar_select %p212, %s19, 0
      %s214 = smul.addr %s211, 32
      %s215 = sadd.s32 %s213, %s214
      %s216 = smul.addr %s215, 8
      %s217 = scalar_lea.vmem %s0, %s216
      %p218 = scmp.lt.s32.totalorder %s19, 0
      %s219 = scalar_select %p218, %s19, 0
      %s220 = smul.addr %s219, 8
      %s221 = scalar_lea.vmem %s1, %s220
      %p222 = scmp.lt.s32.totalorder %s19, 0
      %s223 = scalar_select %p222, %s19, 0
      %s224 = scalar_lea.vmem %s2, %s223
      %p225 = scmp.lt.s32.totalorder %s18, 1
      %s226 = scalar_select %p225, %s18, 1
      %p227 = scmp.lt.s32.totalorder %s19, 0
      %s228 = scalar_select %p227, %s19, 0
      %s229 = smul.addr %s226, 32
      %s230 = sadd.s32 %s228, %s229
      %s231 = smul.addr %s230, 8
      %s232 = scalar_lea.vmem %s3, %s231
      %vm233 = vcmask 31744
      %234 = vst.msk [vmem:[#allocation2] sm:$0xff] %vm233, 0.0
      %235 = vst.msk [vmem:[#allocation2 + $0x8] sm:$0xff] %vm233, 0.0
      %vm236 = vcmask 25600
      %237 = vst.msk [vmem:[#allocation2 + $0x10] sm:$0x3] %vm236, 0.0
      %238 = vst.msk [vmem:[#allocation2 + $0x18] sm:$0xff] %vm233, 0.0
      %239 = vst.msk [vmem:[#allocation2 + $0x20] sm:$0xff] %vm233, 0.0
      %240 = vst.msk [vmem:[#allocation2 + $0x28] sm:$0x3] %vm236, 0.0
      %241 = vst.msk [vmem:[#allocation2 + $0x30] sm:$0xff] %vm233, 0.0
      %242 = vst.msk [vmem:[#allocation2 + $0x38] sm:$0xff] %vm233, 0.0
      %243 = vst.msk [vmem:[#allocation2 + $0x40] sm:$0x3] %vm236, 0.0
      %244 = vst.msk [vmem:[#allocation2 + $0x48] sm:$0xff] %vm233, 0.0
      %245 = vst.msk [vmem:[#allocation2 + $0x50] sm:$0xff] %vm233, 0.0
      %246 = vst.msk [vmem:[#allocation2 + $0x58] sm:$0x3] %vm236, 0.0
      %247 = vst.msk [vmem:[#allocation2 + $0x60] sm:$0xff] %vm233, 0.0
      %248 = vst.msk [vmem:[#allocation2 + $0x68] sm:$0xff] %vm233, 0.0
      %249 = vst.msk [vmem:[#allocation2 + $0x70] sm:$0x3] %vm236, 0.0
      %250 = vst.msk [vmem:[#allocation2 + $0x78] sm:$0xff] %vm233, 0.0
      %251 = vst.msk [vmem:[#allocation2 + $0x80] sm:$0xff] %vm233, 0.0
      %252 = vst.msk [vmem:[#allocation2 + $0x88] sm:$0x3] %vm236, 0.0
      %253 = vst.msk [vmem:[#allocation2 + $0x90] sm:$0xff] %vm233, 0.0
      %254 = vst.msk [vmem:[#allocation2 + $0x98] sm:$0xff] %vm233, 0.0
      %255 = vst.msk [vmem:[#allocation2 + $0xa0] sm:$0x3] %vm236, 0.0
      %256 = vst.msk [vmem:[#allocation2 + $0xa8] sm:$0xff] %vm233, 0.0
      %257 = vst.msk [vmem:[#allocation2 + $0xb0] sm:$0xff] %vm233, 0.0
      %258 = vst.msk [vmem:[#allocation2 + $0xb8] sm:$0x3] %vm236, 0.0
      %259 = vst.msk [vmem:[#allocation2 + $0xc0] sm:$0xff] %vm233, 0.0
      %260 = vst.msk [vmem:[#allocation2 + $0xc8] sm:$0xff] %vm233, 0.0
      %261 = vst.msk [vmem:[#allocation2 + $0xd0] sm:$0x3] %vm236, 0.0
      %262 = vst.msk [vmem:[#allocation2 + $0xd8] sm:$0xff] %vm233, 0.0
      %263 = vst.msk [vmem:[#allocation2 + $0xe0] sm:$0xff] %vm233, 0.0
      %264 = vst.msk [vmem:[#allocation2 + $0xe8] sm:$0x3] %vm236, 0.0
      %265 = vst.msk [vmem:[#allocation2 + $0xf0] sm:$0xff] %vm233, 0.0
      %266 = vst.msk [vmem:[#allocation2 + $0xf8] sm:$0xff] %vm233, 0.0
      %267 = vst.msk [vmem:[#allocation2 + $0x100] sm:$0x3] %vm236, 0.0
      %268 = vst.msk [vmem:[#allocation2 + $0x108] sm:$0xff] %vm233, 0.0
      %269 = vst.msk [vmem:[#allocation2 + $0x110] sm:$0xff] %vm233, 0.0
      %270 = vst.msk [vmem:[#allocation2 + $0x118] sm:$0x3] %vm236, 0.0
      %271 = vst.msk [vmem:[#allocation2 + $0x120] sm:$0xff] %vm233, 0.0
      %272 = vst.msk [vmem:[#allocation2 + $0x128] sm:$0xff] %vm233, 0.0
      %273 = vst.msk [vmem:[#allocation2 + $0x130] sm:$0x3] %vm236, 0.0
      %274 = vst.msk [vmem:[#allocation2 + $0x138] sm:$0xff] %vm233, 0.0
      %275 = vst.msk [vmem:[#allocation2 + $0x140] sm:$0xff] %vm233, 0.0
      %276 = vst.msk [vmem:[#allocation2 + $0x148] sm:$0x3] %vm236, 0.0
      %277 = vst.msk [vmem:[#allocation2 + $0x150] sm:$0xff] %vm233, 0.0
      %278 = vst.msk [vmem:[#allocation2 + $0x158] sm:$0xff] %vm233, 0.0
      %279 = vst.msk [vmem:[#allocation2 + $0x160] sm:$0x3] %vm236, 0.0
      %280 = vst.msk [vmem:[#allocation2 + $0x168] sm:$0xff] %vm233, 0.0
      %281 = vst.msk [vmem:[#allocation2 + $0x170] sm:$0xff] %vm233, 0.0
      %282 = vst.msk [vmem:[#allocation2 + $0x178] sm:$0x3] %vm236, 0.0
      %283 = vst.msk [vmem:[#allocation2 + $0x180] sm:$0xff] %vm233, 0.0
      %284 = vst.msk [vmem:[#allocation2 + $0x188] sm:$0xff] %vm233, 0.0
      %285 = vst.msk [vmem:[#allocation2 + $0x190] sm:$0x3] %vm236, 0.0
      %286 = vst.msk [vmem:[#allocation2 + $0x198] sm:$0xff] %vm233, 0.0
      %287 = vst.msk [vmem:[#allocation2 + $0x1a0] sm:$0xff] %vm233, 0.0
      %288 = vst.msk [vmem:[#allocation2 + $0x1a8] sm:$0x3] %vm236, 0.0
      %v289 = vld [vmem:[%s217] sm:$0xff]
      %v290 = vld [vmem:[%s217 + $0x8] sm:$0xff]
      %v291 = vld [vmem:[%s217 + $0x10] sm:$0xff]
      %v292 = vld [vmem:[%s217 + $0x18] sm:$0xff]
      %v293 = vld [vmem:[%s217 + $0x20] sm:$0xff]
      %v294 = vld [vmem:[%s217 + $0x28] sm:$0xff]
      %v295 = vld [vmem:[%s217 + $0x30] sm:$0xff]
      %v296 = vld [vmem:[%s217 + $0x38] sm:$0xff]
      %v297 = vld [vmem:[%s217 + $0x40] sm:$0xff]
      %v298 = vld [vmem:[%s217 + $0x48] sm:$0xff]
      %v299 = vld [vmem:[%s217 + $0x50] sm:$0xff]
      %v300 = vld [vmem:[%s217 + $0x58] sm:$0xff]
      %v301 = vld [vmem:[%s217 + $0x60] sm:$0xff]
      %v302 = vld [vmem:[%s217 + $0x68] sm:$0xff]
      %v303 = vld [vmem:[%s217 + $0x70] sm:$0xff]
      %v304 = vld [vmem:[%s217 + $0x78] sm:$0xff]
      %v305 = vld [vmem:[%s217 + $0x80] sm:$0xff]
      %v306 = vld [vmem:[%s217 + $0x88] sm:$0xff]
      %v307 = vld [vmem:[%s217 + $0x90] sm:$0xff]
      %v308 = vld [vmem:[%s217 + $0x98] sm:$0xff]
      %v309 = vld [vmem:[%s217 + $0xa0] sm:$0xff]
      %v310 = vld [vmem:[%s217 + $0xa8] sm:$0xff]
      %v311 = vld [vmem:[%s217 + $0xb0] sm:$0xff]
      %v312 = vld [vmem:[%s217 + $0xb8] sm:$0xff]
      %v313 = vld [vmem:[%s217 + $0xc0] sm:$0xff]
      %v314 = vld [vmem:[%s217 + $0xc8] sm:$0xff]
      %v315 = vld [vmem:[%s217 + $0xd0] sm:$0xff]
      %v316 = vld [vmem:[%s217 + $0xd8] sm:$0xff]
      %v317 = vld [vmem:[%s217 + $0xe0] sm:$0xff]
      %v318 = vld [vmem:[%s217 + $0xe8] sm:$0xff]
      %v319 = vld [vmem:[%s217 + $0xf0] sm:$0xff]
      %v320 = vld [vmem:[%s217 + $0xf8] sm:$0xff]
      %s321 = scalar_lea.vmem [#allocation2], 24
      %322 = vst.msk [vmem:[%s321 + $0x1] sm:$0xff] %vm233, %v289
      %323 = vst.msk [vmem:[%s321 + $0x9] sm:$0xff] %vm233, %v290
      %324 = vst.msk [vmem:[%s321 + $0x19] sm:$0xff] %vm233, %v291
      %325 = vst.msk [vmem:[%s321 + $0x21] sm:$0xff] %vm233, %v292
      %326 = vst.msk [vmem:[%s321 + $0x31] sm:$0xff] %vm233, %v293
      %327 = vst.msk [vmem:[%s321 + $0x39] sm:$0xff] %vm233, %v294
      %328 = vst.msk [vmem:[%s321 + $0x49] sm:$0xff] %vm233, %v295
      %329 = vst.msk [vmem:[%s321 + $0x51] sm:$0xff] %vm233, %v296
      %330 = vst.msk [vmem:[%s321 + $0x61] sm:$0xff] %vm233, %v297
      %331 = vst.msk [vmem:[%s321 + $0x69] sm:$0xff] %vm233, %v298
      %332 = vst.msk [vmem:[%s321 + $0x79] sm:$0xff] %vm233, %v299
      %333 = vst.msk [vmem:[%s321 + $0x81] sm:$0xff] %vm233, %v300
      %334 = vst.msk [vmem:[%s321 + $0x91] sm:$0xff] %vm233, %v301
      %335 = vst.msk [vmem:[%s321 + $0x99] sm:$0xff] %vm233, %v302
      %336 = vst.msk [vmem:[%s321 + $0xa9] sm:$0xff] %vm233, %v303
      %337 = vst.msk [vmem:[%s321 + $0xb1] sm:$0xff] %vm233, %v304
      %338 = vst.msk [vmem:[%s321 + $0xc1] sm:$0xff] %vm233, %v305
      %339 = vst.msk [vmem:[%s321 + $0xc9] sm:$0xff] %vm233, %v306
      %340 = vst.msk [vmem:[%s321 + $0xd9] sm:$0xff] %vm233, %v307
      %341 = vst.msk [vmem:[%s321 + $0xe1] sm:$0xff] %vm233, %v308
      %342 = vst.msk [vmem:[%s321 + $0xf1] sm:$0xff] %vm233, %v309
      %343 = vst.msk [vmem:[%s321 + $0xf9] sm:$0xff] %vm233, %v310
      %344 = vst.msk [vmem:[%s321 + $0x109] sm:$0xff] %vm233, %v311
      %345 = vst.msk [vmem:[%s321 + $0x111] sm:$0xff] %vm233, %v312
      %346 = vst.msk [vmem:[%s321 + $0x121] sm:$0xff] %vm233, %v313
      %347 = vst.msk [vmem:[%s321 + $0x129] sm:$0xff] %vm233, %v314
      %348 = vst.msk [vmem:[%s321 + $0x139] sm:$0xff] %vm233, %v315
      %349 = vst.msk [vmem:[%s321 + $0x141] sm:$0xff] %vm233, %v316
      %350 = vst.msk [vmem:[%s321 + $0x151] sm:$0xff] %vm233, %v317
      %351 = vst.msk [vmem:[%s321 + $0x159] sm:$0xff] %vm233, %v318
      %352 = vst.msk [vmem:[%s321 + $0x169] sm:$0xff] %vm233, %v319
      %353 = vst.msk [vmem:[%s321 + $0x171] sm:$0xff] %vm233, %v320
      %v354 = vld [vmem:[%s221] sm:$0x1]
      %v355 = vld [vmem:[#allocation2] sm:$0xff]
      %v356 = vld [vmem:[#allocation2 + $0x8] sm:$0xff]
      %v357 = vld [vmem:[#allocation2 + $0x18] sm:$0xff]
      %v358 = vld [vmem:[#allocation2 + $0x20] sm:$0xff]
      %v359 = vld [vmem:[#allocation2 + $0x30] sm:$0xff]
      %v360 = vld [vmem:[#allocation2 + $0x38] sm:$0xff]
      %v361 = vld [vmem:[#allocation2 + $0x48] sm:$0xff]
      %v362 = vld [vmem:[#allocation2 + $0x50] sm:$0xff]
      %v363 = vld [vmem:[#allocation2 + $0x60] sm:$0xff]
      %v364 = vld [vmem:[#allocation2 + $0x68] sm:$0xff]
      %v365 = vld [vmem:[#allocation2 + $0x78] sm:$0xff]
      %v366 = vld [vmem:[#allocation2 + $0x80] sm:$0xff]
      %v367 = vld [vmem:[#allocation2 + $0x90] sm:$0xff]
      %v368 = vld [vmem:[#allocation2 + $0x98] sm:$0xff]
      %v369 = vld [vmem:[#allocation2 + $0xa8] sm:$0xff]
      %v370 = vld [vmem:[#allocation2 + $0xb0] sm:$0xff]
      %v371 = vld [vmem:[#allocation2 + $0xc0] sm:$0xff]
      %v372 = vld [vmem:[#allocation2 + $0xc8] sm:$0xff]
      %v373 = vld [vmem:[#allocation2 + $0xd8] sm:$0xff]
      %v374 = vld [vmem:[#allocation2 + $0xe0] sm:$0xff]
      %v375 = vld [vmem:[#allocation2 + $0xf0] sm:$0xff]
      %v376 = vld [vmem:[#allocation2 + $0xf8] sm:$0xff]
      %v377 = vld [vmem:[#allocation2 + $0x108] sm:$0xff]
      %v378 = vld [vmem:[#allocation2 + $0x110] sm:$0xff]
      %v379 = vld [vmem:[#allocation2 + $0x120] sm:$0xff]
      %v380 = vld [vmem:[#allocation2 + $0x128] sm:$0xff]
      %v381 = vld [vmem:[#allocation2 + $0x138] sm:$0xff]
      %v382 = vld [vmem:[#allocation2 + $0x140] sm:$0xff]
      %v383 = vld [vmem:[#allocation2 + $0x150] sm:$0xff]
      %v384 = vld [vmem:[#allocation2 + $0x158] sm:$0xff]
      %v385 = vld [vmem:[#allocation2 + $0x168] sm:$0xff]
      %v386 = vld [vmem:[#allocation2 + $0x170] sm:$0xff]
      %v387 = vlaneseq
      %v388 = vshrl.u32 %v387, 7
      %v389 = vsub.s32 0, %v388
      %v390 = vrot.slane %v354, %v389
      %v391 = vmul.f32 %v355, %v390
      %v392 = vmul.f32 %v356, %v390
      %v393 = vmul.f32 %v357, %v390
      %v394 = vmul.f32 %v358, %v390
      %v395 = vmul.f32 %v359, %v390
      %v396 = vmul.f32 %v360, %v390
      %v397 = vmul.f32 %v361, %v390
      %v398 = vmul.f32 %v362, %v390
      %v399 = vmul.f32 %v363, %v390
      %v400 = vmul.f32 %v364, %v390
      %v401 = vmul.f32 %v365, %v390
      %v402 = vmul.f32 %v366, %v390
      %v403 = vmul.f32 %v367, %v390
      %v404 = vmul.f32 %v368, %v390
      %v405 = vmul.f32 %v369, %v390
      %v406 = vmul.f32 %v370, %v390
      %v407 = vmul.f32 %v371, %v390
      %v408 = vmul.f32 %v372, %v390
      %v409 = vmul.f32 %v373, %v390
      %v410 = vmul.f32 %v374, %v390
      %v411 = vmul.f32 %v375, %v390
      %v412 = vmul.f32 %v376, %v390
      %v413 = vmul.f32 %v377, %v390
      %v414 = vmul.f32 %v378, %v390
      %v415 = vmul.f32 %v379, %v390
      %v416 = vmul.f32 %v380, %v390
      %v417 = vmul.f32 %v381, %v390
      %v418 = vmul.f32 %v382, %v390
      %v419 = vmul.f32 %v383, %v390
      %v420 = vmul.f32 %v384, %v390
      %v421 = vmul.f32 %v385, %v390
      %v422 = vmul.f32 %v386, %v390
      %v423 = vadd.f32 %v391, 0.0
      %v424 = vadd.f32 %v392, 0.0
      %v425 = vadd.f32 %v393, 0.0
      %v426 = vadd.f32 %v394, 0.0
      %v427 = vadd.f32 %v395, 0.0
      %v428 = vadd.f32 %v396, 0.0
      %v429 = vadd.f32 %v397, 0.0
      %v430 = vadd.f32 %v398, 0.0
      %v431 = vadd.f32 %v399, 0.0
      %v432 = vadd.f32 %v400, 0.0
      %v433 = vadd.f32 %v401, 0.0
      %v434 = vadd.f32 %v402, 0.0
      %v435 = vadd.f32 %v403, 0.0
      %v436 = vadd.f32 %v404, 0.0
      %v437 = vadd.f32 %v405, 0.0
      %v438 = vadd.f32 %v406, 0.0
      %v439 = vadd.f32 %v407, 0.0
      %v440 = vadd.f32 %v408, 0.0
      %v441 = vadd.f32 %v409, 0.0
      %v442 = vadd.f32 %v410, 0.0
      %v443 = vadd.f32 %v411, 0.0
      %v444 = vadd.f32 %v412, 0.0
      %v445 = vadd.f32 %v413, 0.0
      %v446 = vadd.f32 %v414, 0.0
      %v447 = vadd.f32 %v415, 0.0
      %v448 = vadd.f32 %v416, 0.0
      %v449 = vadd.f32 %v417, 0.0
      %v450 = vadd.f32 %v418, 0.0
      %v451 = vadd.f32 %v419, 0.0
      %v452 = vadd.f32 %v420, 0.0
      %v453 = vadd.f32 %v421, 0.0
      %v454 = vadd.f32 %v422, 0.0
      %v455 = vld [vmem:[%s221 + $0x1] sm:$0x1]
      %v456 = vld [vmem:[#allocation2 + $0x1] sm:$0xff]
      %v457 = vld [vmem:[#allocation2 + $0x9] sm:$0xff]
      %v458 = vld [vmem:[#allocation2 + $0x19] sm:$0xff]
      %v459 = vld [vmem:[#allocation2 + $0x21] sm:$0xff]
      %v460 = vld [vmem:[#allocation2 + $0x31] sm:$0xff]
      %v461 = vld [vmem:[#allocation2 + $0x39] sm:$0xff]
      %v462 = vld [vmem:[#allocation2 + $0x49] sm:$0xff]
      %v463 = vld [vmem:[#allocation2 + $0x51] sm:$0xff]
      %v464 = vld [vmem:[#allocation2 + $0x61] sm:$0xff]
      %v465 = vld [vmem:[#allocation2 + $0x69] sm:$0xff]
      %v466 = vld [vmem:[#allocation2 + $0x79] sm:$0xff]
      %v467 = vld [vmem:[#allocation2 + $0x81] sm:$0xff]
      %v468 = vld [vmem:[#allocation2 + $0x91] sm:$0xff]
      %v469 = vld [vmem:[#allocation2 + $0x99] sm:$0xff]
      %v470 = vld [vmem:[#allocation2 + $0xa9] sm:$0xff]
      %v471 = vld [vmem:[#allocation2 + $0xb1] sm:$0xff]
      %v472 = vld [vmem:[#allocation2 + $0xc1] sm:$0xff]
      %v473 = vld [vmem:[#allocation2 + $0xc9] sm:$0xff]
      %v474 = vld [vmem:[#allocation2 + $0xd9] sm:$0xff]
      %v475 = vld [vmem:[#allocation2 + $0xe1] sm:$0xff]
      %v476 = vld [vmem:[#allocation2 + $0xf1] sm:$0xff]
      %v477 = vld [vmem:[#allocation2 + $0xf9] sm:$0xff]
      %v478 = vld [vmem:[#allocation2 + $0x109] sm:$0xff]
      %v479 = vld [vmem:[#allocation2 + $0x111] sm:$0xff]
      %v480 = vld [vmem:[#allocation2 + $0x121] sm:$0xff]
      %v481 = vld [vmem:[#allocation2 + $0x129] sm:$0xff]
      %v482 = vld [vmem:[#allocation2 + $0x139] sm:$0xff]
      %v483 = vld [vmem:[#allocation2 + $0x141] sm:$0xff]
      %v484 = vld [vmem:[#allocation2 + $0x151] sm:$0xff]
      %v485 = vld [vmem:[#allocation2 + $0x159] sm:$0xff]
      %v486 = vld [vmem:[#allocation2 + $0x169] sm:$0xff]
      %v487 = vld [vmem:[#allocation2 + $0x171] sm:$0xff]
      %v488 = vlaneseq
      %v489 = vshrl.u32 %v488, 7
      %v490 = vsub.s32 0, %v489
      %v491 = vrot.slane %v455, %v490
      %v492 = vmul.f32 %v456, %v491
      %v493 = vmul.f32 %v457, %v491
      %v494 = vmul.f32 %v458, %v491
      %v495 = vmul.f32 %v459, %v491
      %v496 = vmul.f32 %v460, %v491
      %v497 = vmul.f32 %v461, %v491
      %v498 = vmul.f32 %v462, %v491
      %v499 = vmul.f32 %v463, %v491
      %v500 = vmul.f32 %v464, %v491
      %v501 = vmul.f32 %v465, %v491
      %v502 = vmul.f32 %v466, %v491
      %v503 = vmul.f32 %v467, %v491
      %v504 = vmul.f32 %v468, %v491
      %v505 = vmul.f32 %v469, %v491
      %v506 = vmul.f32 %v470, %v491
      %v507 = vmul.f32 %v471, %v491
      %v508 = vmul.f32 %v472, %v491
      %v509 = vmul.f32 %v473, %v491
      %v510 = vmul.f32 %v474, %v491
      %v511 = vmul.f32 %v475, %v491
      %v512 = vmul.f32 %v476, %v491
      %v513 = vmul.f32 %v477, %v491
      %v514 = vmul.f32 %v478, %v491
      %v515 = vmul.f32 %v479, %v491
      %v516 = vmul.f32 %v480, %v491
      %v517 = vmul.f32 %v481, %v491
      %v518 = vmul.f32 %v482, %v491
      %v519 = vmul.f32 %v483, %v491
      %v520 = vmul.f32 %v484, %v491
      %v521 = vmul.f32 %v485, %v491
      %v522 = vmul.f32 %v486, %v491
      %v523 = vmul.f32 %v487, %v491
      %v524 = vadd.f32 %v423, %v492
      %v525 = vadd.f32 %v424, %v493
      %v526 = vadd.f32 %v425, %v494
      %v527 = vadd.f32 %v426, %v495
      %v528 = vadd.f32 %v427, %v496
      %v529 = vadd.f32 %v428, %v497
      %v530 = vadd.f32 %v429, %v498
      %v531 = vadd.f32 %v430, %v499
      %v532 = vadd.f32 %v431, %v500
      %v533 = vadd.f32 %v432, %v501
      %v534 = vadd.f32 %v433, %v502
      %v535 = vadd.f32 %v434, %v503
      %v536 = vadd.f32 %v435, %v504
      %v537 = vadd.f32 %v436, %v505
      %v538 = vadd.f32 %v437, %v506
      %v539 = vadd.f32 %v438, %v507
      %v540 = vadd.f32 %v439, %v508
      %v541 = vadd.f32 %v440, %v509
      %v542 = vadd.f32 %v441, %v510
      %v543 = vadd.f32 %v442, %v511
      %v544 = vadd.f32 %v443, %v512
      %v545 = vadd.f32 %v444, %v513
      %v546 = vadd.f32 %v445, %v514
      %v547 = vadd.f32 %v446, %v515
      %v548 = vadd.f32 %v447, %v516
      %v549 = vadd.f32 %v448, %v517
      %v550 = vadd.f32 %v449, %v518
      %v551 = vadd.f32 %v450, %v519
      %v552 = vadd.f32 %v451, %v520
      %v553 = vadd.f32 %v452, %v521
      %v554 = vadd.f32 %v453, %v522
      %v555 = vadd.f32 %v454, %v523
      %v556 = vld [vmem:[%s221 + $0x2] sm:$0x1]
      %v557 = vld [vmem:[#allocation2 + $0x2] sm:$0xff]
      %v558 = vld [vmem:[#allocation2 + $0xa] sm:$0xff]
      %v559 = vld [vmem:[#allocation2 + $0x1a] sm:$0xff]
      %v560 = vld [vmem:[#allocation2 + $0x22] sm:$0xff]
      %v561 = vld [vmem:[#allocation2 + $0x32] sm:$0xff]
      %v562 = vld [vmem:[#allocation2 + $0x3a] sm:$0xff]
      %v563 = vld [vmem:[#allocation2 + $0x4a] sm:$0xff]
      %v564 = vld [vmem:[#allocation2 + $0x52] sm:$0xff]
      %v565 = vld [vmem:[#allocation2 + $0x62] sm:$0xff]
      %v566 = vld [vmem:[#allocation2 + $0x6a] sm:$0xff]
      %v567 = vld [vmem:[#allocation2 + $0x7a] sm:$0xff]
      %v568 = vld [vmem:[#allocation2 + $0x82] sm:$0xff]
      %v569 = vld [vmem:[#allocation2 + $0x92] sm:$0xff]
      %v570 = vld [vmem:[#allocation2 + $0x9a] sm:$0xff]
      %v571 = vld [vmem:[#allocation2 + $0xaa] sm:$0xff]
      %v572 = vld [vmem:[#allocation2 + $0xb2] sm:$0xff]
      %v573 = vld [vmem:[#allocation2 + $0xc2] sm:$0xff]
      %v574 = vld [vmem:[#allocation2 + $0xca] sm:$0xff]
      %v575 = vld [vmem:[#allocation2 + $0xda] sm:$0xff]
      %v576 = vld [vmem:[#allocation2 + $0xe2] sm:$0xff]
      %v577 = vld [vmem:[#allocation2 + $0xf2] sm:$0xff]
      %v578 = vld [vmem:[#allocation2 + $0xfa] sm:$0xff]
      %v579 = vld [vmem:[#allocation2 + $0x10a] sm:$0xff]
      %v580 = vld [vmem:[#allocation2 + $0x112] sm:$0xff]
      %v581 = vld [vmem:[#allocation2 + $0x122] sm:$0xff]
      %v582 = vld [vmem:[#allocation2 + $0x12a] sm:$0xff]
      %v583 = vld [vmem:[#allocation2 + $0x13a] sm:$0xff]
      %v584 = vld [vmem:[#allocation2 + $0x142] sm:$0xff]
      %v585 = vld [vmem:[#allocation2 + $0x152] sm:$0xff]
      %v586 = vld [vmem:[#allocation2 + $0x15a] sm:$0xff]
      %v587 = vld [vmem:[#allocation2 + $0x16a] sm:$0xff]
      %v588 = vld [vmem:[#allocation2 + $0x172] sm:$0xff]
      %v589 = vlaneseq
      %v590 = vshrl.u32 %v589, 7
      %v591 = vsub.s32 0, %v590
      %v592 = vrot.slane %v556, %v591
      %v593 = vmul.f32 %v557, %v592
      %v594 = vmul.f32 %v558, %v592
      %v595 = vmul.f32 %v559, %v592
      %v596 = vmul.f32 %v560, %v592
      %v597 = vmul.f32 %v561, %v592
      %v598 = vmul.f32 %v562, %v592
      %v599 = vmul.f32 %v563, %v592
      %v600 = vmul.f32 %v564, %v592
      %v601 = vmul.f32 %v565, %v592
      %v602 = vmul.f32 %v566, %v592
      %v603 = vmul.f32 %v567, %v592
      %v604 = vmul.f32 %v568, %v592
      %v605 = vmul.f32 %v569, %v592
      %v606 = vmul.f32 %v570, %v592
      %v607 = vmul.f32 %v571, %v592
      %v608 = vmul.f32 %v572, %v592
      %v609 = vmul.f32 %v573, %v592
      %v610 = vmul.f32 %v574, %v592
      %v611 = vmul.f32 %v575, %v592
      %v612 = vmul.f32 %v576, %v592
      %v613 = vmul.f32 %v577, %v592
      %v614 = vmul.f32 %v578, %v592
      %v615 = vmul.f32 %v579, %v592
      %v616 = vmul.f32 %v580, %v592
      %v617 = vmul.f32 %v581, %v592
      %v618 = vmul.f32 %v582, %v592
      %v619 = vmul.f32 %v583, %v592
      %v620 = vmul.f32 %v584, %v592
      %v621 = vmul.f32 %v585, %v592
      %v622 = vmul.f32 %v586, %v592
      %v623 = vmul.f32 %v587, %v592
      %v624 = vmul.f32 %v588, %v592
      %v625 = vadd.f32 %v524, %v593
      %v626 = vadd.f32 %v525, %v594
      %v627 = vadd.f32 %v526, %v595
      %v628 = vadd.f32 %v527, %v596
      %v629 = vadd.f32 %v528, %v597
      %v630 = vadd.f32 %v529, %v598
      %v631 = vadd.f32 %v530, %v599
      %v632 = vadd.f32 %v531, %v600
      %v633 = vadd.f32 %v532, %v601
      %v634 = vadd.f32 %v533, %v602
      %v635 = vadd.f32 %v534, %v603
      %v636 = vadd.f32 %v535, %v604
      %v637 = vadd.f32 %v536, %v605
      %v638 = vadd.f32 %v537, %v606
      %v639 = vadd.f32 %v538, %v607
      %v640 = vadd.f32 %v539, %v608
      %v641 = vadd.f32 %v540, %v609
      %v642 = vadd.f32 %v541, %v610
      %v643 = vadd.f32 %v542, %v611
      %v644 = vadd.f32 %v543, %v612
      %v645 = vadd.f32 %v544, %v613
      %v646 = vadd.f32 %v545, %v614
      %v647 = vadd.f32 %v546, %v615
      %v648 = vadd.f32 %v547, %v616
      %v649 = vadd.f32 %v548, %v617
      %v650 = vadd.f32 %v549, %v618
      %v651 = vadd.f32 %v550, %v619
      %v652 = vadd.f32 %v551, %v620
      %v653 = vadd.f32 %v552, %v621
      %v654 = vadd.f32 %v553, %v622
      %v655 = vadd.f32 %v554, %v623
      %v656 = vadd.f32 %v555, %v624
      %v657 = vld [vmem:[%s221 + $0x3] sm:$0x1]
      %v658 = vld [vmem:[%s321] sm:$0xff]
      %v659 = vld [vmem:[%s321 + $0x8] sm:$0xff]
      %v660 = vld [vmem:[%s321 + $0x18] sm:$0xff]
      %v661 = vld [vmem:[%s321 + $0x20] sm:$0xff]
      %v662 = vld [vmem:[%s321 + $0x30] sm:$0xff]
      %v663 = vld [vmem:[%s321 + $0x38] sm:$0xff]
      %v664 = vld [vmem:[%s321 + $0x48] sm:$0xff]
      %v665 = vld [vmem:[%s321 + $0x50] sm:$0xff]
      %v666 = vld [vmem:[%s321 + $0x60] sm:$0xff]
      %v667 = vld [vmem:[%s321 + $0x68] sm:$0xff]
      %v668 = vld [vmem:[%s321 + $0x78] sm:$0xff]
      %v669 = vld [vmem:[%s321 + $0x80] sm:$0xff]
      %v670 = vld [vmem:[%s321 + $0x90] sm:$0xff]
      %v671 = vld [vmem:[%s321 + $0x98] sm:$0xff]
      %v672 = vld [vmem:[%s321 + $0xa8] sm:$0xff]
      %v673 = vld [vmem:[%s321 + $0xb0] sm:$0xff]
      %v674 = vld [vmem:[%s321 + $0xc0] sm:$0xff]
      %v675 = vld [vmem:[%s321 + $0xc8] sm:$0xff]
      %v676 = vld [vmem:[%s321 + $0xd8] sm:$0xff]
      %v677 = vld [vmem:[%s321 + $0xe0] sm:$0xff]
      %v678 = vld [vmem:[%s321 + $0xf0] sm:$0xff]
      %v679 = vld [vmem:[%s321 + $0xf8] sm:$0xff]
      %v680 = vld [vmem:[%s321 + $0x108] sm:$0xff]
      %v681 = vld [vmem:[%s321 + $0x110] sm:$0xff]
      %v682 = vld [vmem:[%s321 + $0x120] sm:$0xff]
      %v683 = vld [vmem:[%s321 + $0x128] sm:$0xff]
      %v684 = vld [vmem:[%s321 + $0x138] sm:$0xff]
      %v685 = vld [vmem:[%s321 + $0x140] sm:$0xff]
      %v686 = vld [vmem:[%s321 + $0x150] sm:$0xff]
      %v687 = vld [vmem:[%s321 + $0x158] sm:$0xff]
      %v688 = vld [vmem:[%s321 + $0x168] sm:$0xff]
      %v689 = vld [vmem:[%s321 + $0x170] sm:$0xff]
      %v690 = vlaneseq
      %v691 = vshrl.u32 %v690, 7
      %v692 = vsub.s32 0, %v691
      %v693 = vrot.slane %v657, %v692
      %v694 = vmul.f32 %v658, %v693
      %v695 = vmul.f32 %v659, %v693
      %v696 = vmul.f32 %v660, %v693
      %v697 = vmul.f32 %v661, %v693
      %v698 = vmul.f32 %v662, %v693
      %v699 = vmul.f32 %v663, %v693
      %v700 = vmul.f32 %v664, %v693
      %v701 = vmul.f32 %v665, %v693
      %v702 = vmul.f32 %v666, %v693
      %v703 = vmul.f32 %v667, %v693
      %v704 = vmul.f32 %v668, %v693
      %v705 = vmul.f32 %v669, %v693
      %v706 = vmul.f32 %v670, %v693
      %v707 = vmul.f32 %v671, %v693
      %v708 = vmul.f32 %v672, %v693
      %v709 = vmul.f32 %v673, %v693
      %v710 = vmul.f32 %v674, %v693
      %v711 = vmul.f32 %v675, %v693
      %v712 = vmul.f32 %v676, %v693
      %v713 = vmul.f32 %v677, %v693
      %v714 = vmul.f32 %v678, %v693
      %v715 = vmul.f32 %v679, %v693
      %v716 = vmul.f32 %v680, %v693
      %v717 = vmul.f32 %v681, %v693
      %v718 = vmul.f32 %v682, %v693
      %v719 = vmul.f32 %v683, %v693
      %v720 = vmul.f32 %v684, %v693
      %v721 = vmul.f32 %v685, %v693
      %v722 = vmul.f32 %v686, %v693
      %v723 = vmul.f32 %v687, %v693
      %v724 = vmul.f32 %v688, %v693
      %v725 = vmul.f32 %v689, %v693
      %v726 = vadd.f32 %v625, %v694
      %v727 = vadd.f32 %v626, %v695
      %v728 = vadd.f32 %v627, %v696
      %v729 = vadd.f32 %v628, %v697
      %v730 = vadd.f32 %v629, %v698
      %v731 = vadd.f32 %v630, %v699
      %v732 = vadd.f32 %v631, %v700
      %v733 = vadd.f32 %v632, %v701
      %v734 = vadd.f32 %v633, %v702
      %v735 = vadd.f32 %v634, %v703
      %v736 = vadd.f32 %v635, %v704
      %v737 = vadd.f32 %v636, %v705
      %v738 = vadd.f32 %v637, %v706
      %v739 = vadd.f32 %v638, %v707
      %v740 = vadd.f32 %v639, %v708
      %v741 = vadd.f32 %v640, %v709
      %v742 = vadd.f32 %v641, %v710
      %v743 = vadd.f32 %v642, %v711
      %v744 = vadd.f32 %v643, %v712
      %v745 = vadd.f32 %v644, %v713
      %v746 = vadd.f32 %v645, %v714
      %v747 = vadd.f32 %v646, %v715
      %v748 = vadd.f32 %v647, %v716
      %v749 = vadd.f32 %v648, %v717
      %v750 = vadd.f32 %v649, %v718
      %v751 = vadd.f32 %v650, %v719
      %v752 = vadd.f32 %v651, %v720
      %v753 = vadd.f32 %v652, %v721
      %v754 = vadd.f32 %v653, %v722
      %v755 = vadd.f32 %v654, %v723
      %v756 = vadd.f32 %v655, %v724
      %v757 = vadd.f32 %v656, %v725
      %v758 = vld [vmem:[%s221 + $0x4] sm:$0x1]
      %v759 = vld [vmem:[%s321 + $0x1] sm:$0xff]
      %v760 = vld [vmem:[%s321 + $0x9] sm:$0xff]
      %v761 = vld [vmem:[%s321 + $0x19] sm:$0xff]
      %v762 = vld [vmem:[%s321 + $0x21] sm:$0xff]
      %v763 = vld [vmem:[%s321 + $0x31] sm:$0xff]
      %v764 = vld [vmem:[%s321 + $0x39] sm:$0xff]
      %v765 = vld [vmem:[%s321 + $0x49] sm:$0xff]
      %v766 = vld [vmem:[%s321 + $0x51] sm:$0xff]
      %v767 = vld [vmem:[%s321 + $0x61] sm:$0xff]
      %v768 = vld [vmem:[%s321 + $0x69] sm:$0xff]
      %v769 = vld [vmem:[%s321 + $0x79] sm:$0xff]
      %v770 = vld [vmem:[%s321 + $0x81] sm:$0xff]
      %v771 = vld [vmem:[%s321 + $0x91] sm:$0xff]
      %v772 = vld [vmem:[%s321 + $0x99] sm:$0xff]
      %v773 = vld [vmem:[%s321 + $0xa9] sm:$0xff]
      %v774 = vld [vmem:[%s321 + $0xb1] sm:$0xff]
      %v775 = vld [vmem:[%s321 + $0xc1] sm:$0xff]
      %v776 = vld [vmem:[%s321 + $0xc9] sm:$0xff]
      %v777 = vld [vmem:[%s321 + $0xd9] sm:$0xff]
      %v778 = vld [vmem:[%s321 + $0xe1] sm:$0xff]
      %v779 = vld [vmem:[%s321 + $0xf1] sm:$0xff]
      %v780 = vld [vmem:[%s321 + $0xf9] sm:$0xff]
      %v781 = vld [vmem:[%s321 + $0x109] sm:$0xff]
      %v782 = vld [vmem:[%s321 + $0x111] sm:$0xff]
      %v783 = vld [vmem:[%s321 + $0x121] sm:$0xff]
      %v784 = vld [vmem:[%s321 + $0x129] sm:$0xff]
      %v785 = vld [vmem:[%s321 + $0x139] sm:$0xff]
      %v786 = vld [vmem:[%s321 + $0x141] sm:$0xff]
      %v787 = vld [vmem:[%s321 + $0x151] sm:$0xff]
      %v788 = vld [vmem:[%s321 + $0x159] sm:$0xff]
      %v789 = vld [vmem:[%s321 + $0x169] sm:$0xff]
      %v790 = vld [vmem:[%s321 + $0x171] sm:$0xff]
      %v791 = vlaneseq
      %v792 = vshrl.u32 %v791, 7
      %v793 = vsub.s32 0, %v792
      %v794 = vrot.slane %v758, %v793
      %v795 = vmul.f32 %v759, %v794
      %v796 = vmul.f32 %v760, %v794
      %v797 = vmul.f32 %v761, %v794
      %v798 = vmul.f32 %v762, %v794
      %v799 = vmul.f32 %v763, %v794
      %v800 = vmul.f32 %v764, %v794
      %v801 = vmul.f32 %v765, %v794
      %v802 = vmul.f32 %v766, %v794
      %v803 = vmul.f32 %v767, %v794
      %v804 = vmul.f32 %v768, %v794
      %v805 = vmul.f32 %v769, %v794
      %v806 = vmul.f32 %v770, %v794
      %v807 = vmul.f32 %v771, %v794
      %v808 = vmul.f32 %v772, %v794
      %v809 = vmul.f32 %v773, %v794
      %v810 = vmul.f32 %v774, %v794
      %v811 = vmul.f32 %v775, %v794
      %v812 = vmul.f32 %v776, %v794
      %v813 = vmul.f32 %v777, %v794
      %v814 = vmul.f32 %v778, %v794
      %v815 = vmul.f32 %v779, %v794
      %v816 = vmul.f32 %v780, %v794
      %v817 = vmul.f32 %v781, %v794
      %v818 = vmul.f32 %v782, %v794
      %v819 = vmul.f32 %v783, %v794
      %v820 = vmul.f32 %v784, %v794
      %v821 = vmul.f32 %v785, %v794
      %v822 = vmul.f32 %v786, %v794
      %v823 = vmul.f32 %v787, %v794
      %v824 = vmul.f32 %v788, %v794
      %v825 = vmul.f32 %v789, %v794
      %v826 = vmul.f32 %v790, %v794
      %v827 = vadd.f32 %v726, %v795
      %v828 = vadd.f32 %v727, %v796
      %v829 = vadd.f32 %v728, %v797
      %v830 = vadd.f32 %v729, %v798
      %v831 = vadd.f32 %v730, %v799
      %v832 = vadd.f32 %v731, %v800
      %v833 = vadd.f32 %v732, %v801
      %v834 = vadd.f32 %v733, %v802
      %v835 = vadd.f32 %v734, %v803
      %v836 = vadd.f32 %v735, %v804
      %v837 = vadd.f32 %v736, %v805
      %v838 = vadd.f32 %v737, %v806
      %v839 = vadd.f32 %v738, %v807
      %v840 = vadd.f32 %v739, %v808
      %v841 = vadd.f32 %v740, %v809
      %v842 = vadd.f32 %v741, %v810
      %v843 = vadd.f32 %v742, %v811
      %v844 = vadd.f32 %v743, %v812
      %v845 = vadd.f32 %v744, %v813
      %v846 = vadd.f32 %v745, %v814
      %v847 = vadd.f32 %v746, %v815
      %v848 = vadd.f32 %v747, %v816
      %v849 = vadd.f32 %v748, %v817
      %v850 = vadd.f32 %v749, %v818
      %v851 = vadd.f32 %v750, %v819
      %v852 = vadd.f32 %v751, %v820
      %v853 = vadd.f32 %v752, %v821
      %v854 = vadd.f32 %v753, %v822
      %v855 = vadd.f32 %v754, %v823
      %v856 = vadd.f32 %v755, %v824
      %v857 = vadd.f32 %v756, %v825
      %v858 = vadd.f32 %v757, %v826
      %v859 = vld [vmem:[%s221 + $0x5] sm:$0x1]
      %v860 = vld [vmem:[%s321 + $0x2] sm:$0xff]
      %v861 = vld [vmem:[%s321 + $0xa] sm:$0xff]
      %v862 = vld [vmem:[%s321 + $0x1a] sm:$0xff]
      %v863 = vld [vmem:[%s321 + $0x22] sm:$0xff]
      %v864 = vld [vmem:[%s321 + $0x32] sm:$0xff]
      %v865 = vld [vmem:[%s321 + $0x3a] sm:$0xff]
      %v866 = vld [vmem:[%s321 + $0x4a] sm:$0xff]
      %v867 = vld [vmem:[%s321 + $0x52] sm:$0xff]
      %v868 = vld [vmem:[%s321 + $0x62] sm:$0xff]
      %v869 = vld [vmem:[%s321 + $0x6a] sm:$0xff]
      %v870 = vld [vmem:[%s321 + $0x7a] sm:$0xff]
      %v871 = vld [vmem:[%s321 + $0x82] sm:$0xff]
      %v872 = vld [vmem:[%s321 + $0x92] sm:$0xff]
      %v873 = vld [vmem:[%s321 + $0x9a] sm:$0xff]
      %v874 = vld [vmem:[%s321 + $0xaa] sm:$0xff]
      %v875 = vld [vmem:[%s321 + $0xb2] sm:$0xff]
      %v876 = vld [vmem:[%s321 + $0xc2] sm:$0xff]
      %v877 = vld [vmem:[%s321 + $0xca] sm:$0xff]
      %v878 = vld [vmem:[%s321 + $0xda] sm:$0xff]
      %v879 = vld [vmem:[%s321 + $0xe2] sm:$0xff]
      %v880 = vld [vmem:[%s321 + $0xf2] sm:$0xff]
      %v881 = vld [vmem:[%s321 + $0xfa] sm:$0xff]
      %v882 = vld [vmem:[%s321 + $0x10a] sm:$0xff]
      %v883 = vld [vmem:[%s321 + $0x112] sm:$0xff]
      %v884 = vld [vmem:[%s321 + $0x122] sm:$0xff]
      %v885 = vld [vmem:[%s321 + $0x12a] sm:$0xff]
      %v886 = vld [vmem:[%s321 + $0x13a] sm:$0xff]
      %v887 = vld [vmem:[%s321 + $0x142] sm:$0xff]
      %v888 = vld [vmem:[%s321 + $0x152] sm:$0xff]
      %v889 = vld [vmem:[%s321 + $0x15a] sm:$0xff]
      %v890 = vld [vmem:[%s321 + $0x16a] sm:$0xff]
      %v891 = vld [vmem:[%s321 + $0x172] sm:$0xff]
      %v892 = vlaneseq
      %v893 = vshrl.u32 %v892, 7
      %v894 = vsub.s32 0, %v893
      %v895 = vrot.slane %v859, %v894
      %v896 = vmul.f32 %v860, %v895
      %v897 = vmul.f32 %v861, %v895
      %v898 = vmul.f32 %v862, %v895
      %v899 = vmul.f32 %v863, %v895
      %v900 = vmul.f32 %v864, %v895
      %v901 = vmul.f32 %v865, %v895
      %v902 = vmul.f32 %v866, %v895
      %v903 = vmul.f32 %v867, %v895
      %v904 = vmul.f32 %v868, %v895
      %v905 = vmul.f32 %v869, %v895
      %v906 = vmul.f32 %v870, %v895
      %v907 = vmul.f32 %v871, %v895
      %v908 = vmul.f32 %v872, %v895
      %v909 = vmul.f32 %v873, %v895
      %v910 = vmul.f32 %v874, %v895
      %v911 = vmul.f32 %v875, %v895
      %v912 = vmul.f32 %v876, %v895
      %v913 = vmul.f32 %v877, %v895
      %v914 = vmul.f32 %v878, %v895
      %v915 = vmul.f32 %v879, %v895
      %v916 = vmul.f32 %v880, %v895
      %v917 = vmul.f32 %v881, %v895
      %v918 = vmul.f32 %v882, %v895
      %v919 = vmul.f32 %v883, %v895
      %v920 = vmul.f32 %v884, %v895
      %v921 = vmul.f32 %v885, %v895
      %v922 = vmul.f32 %v886, %v895
      %v923 = vmul.f32 %v887, %v895
      %v924 = vmul.f32 %v888, %v895
      %v925 = vmul.f32 %v889, %v895
      %v926 = vmul.f32 %v890, %v895
      %v927 = vmul.f32 %v891, %v895
      %v928 = vadd.f32 %v827, %v896
      %v929 = vadd.f32 %v828, %v897
      %v930 = vadd.f32 %v829, %v898
      %v931 = vadd.f32 %v830, %v899
      %v932 = vadd.f32 %v831, %v900
      %v933 = vadd.f32 %v832, %v901
      %v934 = vadd.f32 %v833, %v902
      %v935 = vadd.f32 %v834, %v903
      %v936 = vadd.f32 %v835, %v904
      %v937 = vadd.f32 %v836, %v905
      %v938 = vadd.f32 %v837, %v906
      %v939 = vadd.f32 %v838, %v907
      %v940 = vadd.f32 %v839, %v908
      %v941 = vadd.f32 %v840, %v909
      %v942 = vadd.f32 %v841, %v910
      %v943 = vadd.f32 %v842, %v911
      %v944 = vadd.f32 %v843, %v912
      %v945 = vadd.f32 %v844, %v913
      %v946 = vadd.f32 %v845, %v914
      %v947 = vadd.f32 %v846, %v915
      %v948 = vadd.f32 %v847, %v916
      %v949 = vadd.f32 %v848, %v917
      %v950 = vadd.f32 %v849, %v918
      %v951 = vadd.f32 %v850, %v919
      %v952 = vadd.f32 %v851, %v920
      %v953 = vadd.f32 %v852, %v921
      %v954 = vadd.f32 %v853, %v922
      %v955 = vadd.f32 %v854, %v923
      %v956 = vadd.f32 %v855, %v924
      %v957 = vadd.f32 %v856, %v925
      %v958 = vadd.f32 %v857, %v926
      %v959 = vadd.f32 %v858, %v927
      %v960 = vld [vmem:[%s221 + $0x6] sm:$0x1]
      %s961 = scalar_lea.vmem [#allocation2], 48
      %v962 = vld [vmem:[%s961] sm:$0xff]
      %v963 = vld [vmem:[%s961 + $0x8] sm:$0xff]
      %v964 = vld [vmem:[%s961 + $0x18] sm:$0xff]
      %v965 = vld [vmem:[%s961 + $0x20] sm:$0xff]
      %v966 = vld [vmem:[%s961 + $0x30] sm:$0xff]
      %v967 = vld [vmem:[%s961 + $0x38] sm:$0xff]
      %v968 = vld [vmem:[%s961 + $0x48] sm:$0xff]
      %v969 = vld [vmem:[%s961 + $0x50] sm:$0xff]
      %v970 = vld [vmem:[%s961 + $0x60] sm:$0xff]
      %v971 = vld [vmem:[%s961 + $0x68] sm:$0xff]
      %v972 = vld [vmem:[%s961 + $0x78] sm:$0xff]
      %v973 = vld [vmem:[%s961 + $0x80] sm:$0xff]
      %v974 = vld [vmem:[%s961 + $0x90] sm:$0xff]
      %v975 = vld [vmem:[%s961 + $0x98] sm:$0xff]
      %v976 = vld [vmem:[%s961 + $0xa8] sm:$0xff]
      %v977 = vld [vmem:[%s961 + $0xb0] sm:$0xff]
      %v978 = vld [vmem:[%s961 + $0xc0] sm:$0xff]
      %v979 = vld [vmem:[%s961 + $0xc8] sm:$0xff]
      %v980 = vld [vmem:[%s961 + $0xd8] sm:$0xff]
      %v981 = vld [vmem:[%s961 + $0xe0] sm:$0xff]
      %v982 = vld [vmem:[%s961 + $0xf0] sm:$0xff]
      %v983 = vld [vmem:[%s961 + $0xf8] sm:$0xff]
      %v984 = vld [vmem:[%s961 + $0x108] sm:$0xff]
      %v985 = vld [vmem:[%s961 + $0x110] sm:$0xff]
      %v986 = vld [vmem:[%s961 + $0x120] sm:$0xff]
      %v987 = vld [vmem:[%s961 + $0x128] sm:$0xff]
      %v988 = vld [vmem:[%s961 + $0x138] sm:$0xff]
      %v989 = vld [vmem:[%s961 + $0x140] sm:$0xff]
      %v990 = vld [vmem:[%s961 + $0x150] sm:$0xff]
      %v991 = vld [vmem:[%s961 + $0x158] sm:$0xff]
      %v992 = vld [vmem:[%s961 + $0x168] sm:$0xff]
      %v993 = vld [vmem:[%s961 + $0x170] sm:$0xff]
      %v994 = vlaneseq
      %v995 = vshrl.u32 %v994, 7
      %v996 = vsub.s32 0, %v995
      %v997 = vrot.slane %v960, %v996
      %v998 = vmul.f32 %v962, %v997
      %v999 = vmul.f32 %v963, %v997
      %v1000 = vmul.f32 %v964, %v997
      %v1001 = vmul.f32 %v965, %v997
      %v1002 = vmul.f32 %v966, %v997
      %v1003 = vmul.f32 %v967, %v997
      %v1004 = vmul.f32 %v968, %v997
      %v1005 = vmul.f32 %v969, %v997
      %v1006 = vmul.f32 %v970, %v997
      %v1007 = vmul.f32 %v971, %v997
      %v1008 = vmul.f32 %v972, %v997
      %v1009 = vmul.f32 %v973, %v997
      %v1010 = vmul.f32 %v974, %v997
      %v1011 = vmul.f32 %v975, %v997
      %v1012 = vmul.f32 %v976, %v997
      %v1013 = vmul.f32 %v977, %v997
      %v1014 = vmul.f32 %v978, %v997
      %v1015 = vmul.f32 %v979, %v997
      %v1016 = vmul.f32 %v980, %v997
      %v1017 = vmul.f32 %v981, %v997
      %v1018 = vmul.f32 %v982, %v997
      %v1019 = vmul.f32 %v983, %v997
      %v1020 = vmul.f32 %v984, %v997
      %v1021 = vmul.f32 %v985, %v997
      %v1022 = vmul.f32 %v986, %v997
      %v1023 = vmul.f32 %v987, %v997
      %v1024 = vmul.f32 %v988, %v997
      %v1025 = vmul.f32 %v989, %v997
      %v1026 = vmul.f32 %v990, %v997
      %v1027 = vmul.f32 %v991, %v997
      %v1028 = vmul.f32 %v992, %v997
      %v1029 = vmul.f32 %v993, %v997
      %v1030 = vadd.f32 %v928, %v998
      %v1031 = vadd.f32 %v929, %v999
      %v1032 = vadd.f32 %v930, %v1000
      %v1033 = vadd.f32 %v931, %v1001
      %v1034 = vadd.f32 %v932, %v1002
      %v1035 = vadd.f32 %v933, %v1003
      %v1036 = vadd.f32 %v934, %v1004
      %v1037 = vadd.f32 %v935, %v1005
      %v1038 = vadd.f32 %v936, %v1006
      %v1039 = vadd.f32 %v937, %v1007
      %v1040 = vadd.f32 %v938, %v1008
      %v1041 = vadd.f32 %v939, %v1009
      %v1042 = vadd.f32 %v940, %v1010
      %v1043 = vadd.f32 %v941, %v1011
      %v1044 = vadd.f32 %v942, %v1012
      %v1045 = vadd.f32 %v943, %v1013
      %v1046 = vadd.f32 %v944, %v1014
      %v1047 = vadd.f32 %v945, %v1015
      %v1048 = vadd.f32 %v946, %v1016
      %v1049 = vadd.f32 %v947, %v1017
      %v1050 = vadd.f32 %v948, %v1018
      %v1051 = vadd.f32 %v949, %v1019
      %v1052 = vadd.f32 %v950, %v1020
      %v1053 = vadd.f32 %v951, %v1021
      %v1054 = vadd.f32 %v952, %v1022
      %v1055 = vadd.f32 %v953, %v1023
      %v1056 = vadd.f32 %v954, %v1024
      %v1057 = vadd.f32 %v955, %v1025
      %v1058 = vadd.f32 %v956, %v1026
      %v1059 = vadd.f32 %v957, %v1027
      %v1060 = vadd.f32 %v958, %v1028
      %v1061 = vadd.f32 %v959, %v1029
      %v1062 = vld [vmem:[%s221 + $0x7] sm:$0x1]
      %v1063 = vld [vmem:[%s961 + $0x1] sm:$0xff]
      %v1064 = vld [vmem:[%s961 + $0x9] sm:$0xff]
      %v1065 = vld [vmem:[%s961 + $0x19] sm:$0xff]
      %v1066 = vld [vmem:[%s961 + $0x21] sm:$0xff]
      %v1067 = vld [vmem:[%s961 + $0x31] sm:$0xff]
      %v1068 = vld [vmem:[%s961 + $0x39] sm:$0xff]
      %v1069 = vld [vmem:[%s961 + $0x49] sm:$0xff]
      %v1070 = vld [vmem:[%s961 + $0x51] sm:$0xff]
      %v1071 = vld [vmem:[%s961 + $0x61] sm:$0xff]
      %v1072 = vld [vmem:[%s961 + $0x69] sm:$0xff]
      %v1073 = vld [vmem:[%s961 + $0x79] sm:$0xff]
      %v1074 = vld [vmem:[%s961 + $0x81] sm:$0xff]
      %v1075 = vld [vmem:[%s961 + $0x91] sm:$0xff]
      %v1076 = vld [vmem:[%s961 + $0x99] sm:$0xff]
      %v1077 = vld [vmem:[%s961 + $0xa9] sm:$0xff]
      %v1078 = vld [vmem:[%s961 + $0xb1] sm:$0xff]
      %v1079 = vld [vmem:[%s961 + $0xc1] sm:$0xff]
      %v1080 = vld [vmem:[%s961 + $0xc9] sm:$0xff]
      %v1081 = vld [vmem:[%s961 + $0xd9] sm:$0xff]
      %v1082 = vld [vmem:[%s961 + $0xe1] sm:$0xff]
      %v1083 = vld [vmem:[%s961 + $0xf1] sm:$0xff]
      %v1084 = vld [vmem:[%s961 + $0xf9] sm:$0xff]
      %v1085 = vld [vmem:[%s961 + $0x109] sm:$0xff]
      %v1086 = vld [vmem:[%s961 + $0x111] sm:$0xff]
      %v1087 = vld [vmem:[%s961 + $0x121] sm:$0xff]
      %v1088 = vld [vmem:[%s961 + $0x129] sm:$0xff]
      %v1089 = vld [vmem:[%s961 + $0x139] sm:$0xff]
      %v1090 = vld [vmem:[%s961 + $0x141] sm:$0xff]
      %v1091 = vld [vmem:[%s961 + $0x151] sm:$0xff]
      %v1092 = vld [vmem:[%s961 + $0x159] sm:$0xff]
      %v1093 = vld [vmem:[%s961 + $0x169] sm:$0xff]
      %v1094 = vld [vmem:[%s961 + $0x171] sm:$0xff]
      %v1095 = vlaneseq
      %v1096 = vshrl.u32 %v1095, 7
      %v1097 = vsub.s32 0, %v1096
      %v1098 = vrot.slane %v1062, %v1097
      %v1099 = vmul.f32 %v1063, %v1098
      %v1100 = vmul.f32 %v1064, %v1098
      %v1101 = vmul.f32 %v1065, %v1098
      %v1102 = vmul.f32 %v1066, %v1098
      %v1103 = vmul.f32 %v1067, %v1098
      %v1104 = vmul.f32 %v1068, %v1098
      %v1105 = vmul.f32 %v1069, %v1098
      %v1106 = vmul.f32 %v1070, %v1098
      %v1107 = vmul.f32 %v1071, %v1098
      %v1108 = vmul.f32 %v1072, %v1098
      %v1109 = vmul.f32 %v1073, %v1098
      %v1110 = vmul.f32 %v1074, %v1098
      %v1111 = vmul.f32 %v1075, %v1098
      %v1112 = vmul.f32 %v1076, %v1098
      %v1113 = vmul.f32 %v1077, %v1098
      %v1114 = vmul.f32 %v1078, %v1098
      %v1115 = vmul.f32 %v1079, %v1098
      %v1116 = vmul.f32 %v1080, %v1098
      %v1117 = vmul.f32 %v1081, %v1098
      %v1118 = vmul.f32 %v1082, %v1098
      %v1119 = vmul.f32 %v1083, %v1098
      %v1120 = vmul.f32 %v1084, %v1098
      %v1121 = vmul.f32 %v1085, %v1098
      %v1122 = vmul.f32 %v1086, %v1098
      %v1123 = vmul.f32 %v1087, %v1098
      %v1124 = vmul.f32 %v1088, %v1098
      %v1125 = vmul.f32 %v1089, %v1098
      %v1126 = vmul.f32 %v1090, %v1098
      %v1127 = vmul.f32 %v1091, %v1098
      %v1128 = vmul.f32 %v1092, %v1098
      %v1129 = vmul.f32 %v1093, %v1098
      %v1130 = vmul.f32 %v1094, %v1098
      %v1131 = vadd.f32 %v1030, %v1099
      %v1132 = vadd.f32 %v1031, %v1100
      %v1133 = vadd.f32 %v1032, %v1101
      %v1134 = vadd.f32 %v1033, %v1102
      %v1135 = vadd.f32 %v1034, %v1103
      %v1136 = vadd.f32 %v1035, %v1104
      %v1137 = vadd.f32 %v1036, %v1105
      %v1138 = vadd.f32 %v1037, %v1106
      %v1139 = vadd.f32 %v1038, %v1107
      %v1140 = vadd.f32 %v1039, %v1108
      %v1141 = vadd.f32 %v1040, %v1109
      %v1142 = vadd.f32 %v1041, %v1110
      %v1143 = vadd.f32 %v1042, %v1111
      %v1144 = vadd.f32 %v1043, %v1112
      %v1145 = vadd.f32 %v1044, %v1113
      %v1146 = vadd.f32 %v1045, %v1114
      %v1147 = vadd.f32 %v1046, %v1115
      %v1148 = vadd.f32 %v1047, %v1116
      %v1149 = vadd.f32 %v1048, %v1117
      %v1150 = vadd.f32 %v1049, %v1118
      %v1151 = vadd.f32 %v1050, %v1119
      %v1152 = vadd.f32 %v1051, %v1120
      %v1153 = vadd.f32 %v1052, %v1121
      %v1154 = vadd.f32 %v1053, %v1122
      %v1155 = vadd.f32 %v1054, %v1123
      %v1156 = vadd.f32 %v1055, %v1124
      %v1157 = vadd.f32 %v1056, %v1125
      %v1158 = vadd.f32 %v1057, %v1126
      %v1159 = vadd.f32 %v1058, %v1127
      %v1160 = vadd.f32 %v1059, %v1128
      %v1161 = vadd.f32 %v1060, %v1129
      %v1162 = vadd.f32 %v1061, %v1130
      %v1163 = vld [vmem:[%s221 + $0x8] sm:$0x1]
      %v1164 = vld [vmem:[%s961 + $0x2] sm:$0xff]
      %v1165 = vld [vmem:[%s961 + $0xa] sm:$0xff]
      %v1166 = vld [vmem:[%s961 + $0x1a] sm:$0xff]
      %v1167 = vld [vmem:[%s961 + $0x22] sm:$0xff]
      %v1168 = vld [vmem:[%s961 + $0x32] sm:$0xff]
      %v1169 = vld [vmem:[%s961 + $0x3a] sm:$0xff]
      %v1170 = vld [vmem:[%s961 + $0x4a] sm:$0xff]
      %v1171 = vld [vmem:[%s961 + $0x52] sm:$0xff]
      %v1172 = vld [vmem:[%s961 + $0x62] sm:$0xff]
      %v1173 = vld [vmem:[%s961 + $0x6a] sm:$0xff]
      %v1174 = vld [vmem:[%s961 + $0x7a] sm:$0xff]
      %v1175 = vld [vmem:[%s961 + $0x82] sm:$0xff]
      %v1176 = vld [vmem:[%s961 + $0x92] sm:$0xff]
      %v1177 = vld [vmem:[%s961 + $0x9a] sm:$0xff]
      %v1178 = vld [vmem:[%s961 + $0xaa] sm:$0xff]
      %v1179 = vld [vmem:[%s961 + $0xb2] sm:$0xff]
      %v1180 = vld [vmem:[%s961 + $0xc2] sm:$0xff]
      %v1181 = vld [vmem:[%s961 + $0xca] sm:$0xff]
      %v1182 = vld [vmem:[%s961 + $0xda] sm:$0xff]
      %v1183 = vld [vmem:[%s961 + $0xe2] sm:$0xff]
      %v1184 = vld [vmem:[%s961 + $0xf2] sm:$0xff]
      %v1185 = vld [vmem:[%s961 + $0xfa] sm:$0xff]
      %v1186 = vld [vmem:[%s961 + $0x10a] sm:$0xff]
      %v1187 = vld [vmem:[%s961 + $0x112] sm:$0xff]
      %v1188 = vld [vmem:[%s961 + $0x122] sm:$0xff]
      %v1189 = vld [vmem:[%s961 + $0x12a] sm:$0xff]
      %v1190 = vld [vmem:[%s961 + $0x13a] sm:$0xff]
      %v1191 = vld [vmem:[%s961 + $0x142] sm:$0xff]
      %v1192 = vld [vmem:[%s961 + $0x152] sm:$0xff]
      %v1193 = vld [vmem:[%s961 + $0x15a] sm:$0xff]
      %v1194 = vld [vmem:[%s961 + $0x16a] sm:$0xff]
      %v1195 = vld [vmem:[%s961 + $0x172] sm:$0xff]
      %v1196 = vlaneseq
      %v1197 = vshrl.u32 %v1196, 7
      %v1198 = vsub.s32 0, %v1197
      %v1199 = vrot.slane %v1163, %v1198
      %v1200 = vmul.f32 %v1164, %v1199
      %v1201 = vmul.f32 %v1165, %v1199
      %v1202 = vmul.f32 %v1166, %v1199
      %v1203 = vmul.f32 %v1167, %v1199
      %v1204 = vmul.f32 %v1168, %v1199
      %v1205 = vmul.f32 %v1169, %v1199
      %v1206 = vmul.f32 %v1170, %v1199
      %v1207 = vmul.f32 %v1171, %v1199
      %v1208 = vmul.f32 %v1172, %v1199
      %v1209 = vmul.f32 %v1173, %v1199
      %v1210 = vmul.f32 %v1174, %v1199
      %v1211 = vmul.f32 %v1175, %v1199
      %v1212 = vmul.f32 %v1176, %v1199
      %v1213 = vmul.f32 %v1177, %v1199
      %v1214 = vmul.f32 %v1178, %v1199
      %v1215 = vmul.f32 %v1179, %v1199
      %v1216 = vmul.f32 %v1180, %v1199
      %v1217 = vmul.f32 %v1181, %v1199
      %v1218 = vmul.f32 %v1182, %v1199
      %v1219 = vmul.f32 %v1183, %v1199
      %v1220 = vmul.f32 %v1184, %v1199
      %v1221 = vmul.f32 %v1185, %v1199
      %v1222 = vmul.f32 %v1186, %v1199
      %v1223 = vmul.f32 %v1187, %v1199
      %v1224 = vmul.f32 %v1188, %v1199
      %v1225 = vmul.f32 %v1189, %v1199
      %v1226 = vmul.f32 %v1190, %v1199
      %v1227 = vmul.f32 %v1191, %v1199
      %v1228 = vmul.f32 %v1192, %v1199
      %v1229 = vmul.f32 %v1193, %v1199
      %v1230 = vmul.f32 %v1194, %v1199
      %v1231 = vmul.f32 %v1195, %v1199
      %v1232 = vadd.f32 %v1131, %v1200
      %v1233 = vadd.f32 %v1132, %v1201
      %v1234 = vadd.f32 %v1133, %v1202
      %v1235 = vadd.f32 %v1134, %v1203
      %v1236 = vadd.f32 %v1135, %v1204
      %v1237 = vadd.f32 %v1136, %v1205
      %v1238 = vadd.f32 %v1137, %v1206
      %v1239 = vadd.f32 %v1138, %v1207
      %v1240 = vadd.f32 %v1139, %v1208
      %v1241 = vadd.f32 %v1140, %v1209
      %v1242 = vadd.f32 %v1141, %v1210
      %v1243 = vadd.f32 %v1142, %v1211
      %v1244 = vadd.f32 %v1143, %v1212
      %v1245 = vadd.f32 %v1144, %v1213
      %v1246 = vadd.f32 %v1145, %v1214
      %v1247 = vadd.f32 %v1146, %v1215
      %v1248 = vadd.f32 %v1147, %v1216
      %v1249 = vadd.f32 %v1148, %v1217
      %v1250 = vadd.f32 %v1149, %v1218
      %v1251 = vadd.f32 %v1150, %v1219
      %v1252 = vadd.f32 %v1151, %v1220
      %v1253 = vadd.f32 %v1152, %v1221
      %v1254 = vadd.f32 %v1153, %v1222
      %v1255 = vadd.f32 %v1154, %v1223
      %v1256 = vadd.f32 %v1155, %v1224
      %v1257 = vadd.f32 %v1156, %v1225
      %v1258 = vadd.f32 %v1157, %v1226
      %v1259 = vadd.f32 %v1158, %v1227
      %v1260 = vadd.f32 %v1159, %v1228
      %v1261 = vadd.f32 %v1160, %v1229
      %v1262 = vadd.f32 %v1161, %v1230
      %v1263 = vadd.f32 %v1162, %v1231
      %v1264 = vld [vmem:[%s224] sm:$0x1]
      %v1266 = vlaneseq
      %v1267 = vshrl.u32 %v1266, 7
      %v1268 = vsub.s32 0, %v1267
      %v1269 = vrot.slane %v1264, %v1268
      %v1271 = vadd.f32 %v1232, %v1269
      %v1272 = vadd.f32 %v1233, %v1269
      %v1273 = vadd.f32 %v1234, %v1269
      %v1274 = vadd.f32 %v1235, %v1269
      %v1275 = vadd.f32 %v1236, %v1269
      %v1276 = vadd.f32 %v1237, %v1269
      %v1277 = vadd.f32 %v1238, %v1269
      %v1278 = vadd.f32 %v1239, %v1269
      %v1279 = vadd.f32 %v1240, %v1269
      %v1280 = vadd.f32 %v1241, %v1269
      %v1281 = vadd.f32 %v1242, %v1269
      %v1282 = vadd.f32 %v1243, %v1269
      %v1283 = vadd.f32 %v1244, %v1269
      %v1284 = vadd.f32 %v1245, %v1269
      %v1285 = vadd.f32 %v1246, %v1269
      %v1286 = vadd.f32 %v1247, %v1269
      %v1287 = vadd.f32 %v1248, %v1269
      %v1288 = vadd.f32 %v1249, %v1269
      %v1289 = vadd.f32 %v1250, %v1269
      %v1290 = vadd.f32 %v1251, %v1269
      %v1291 = vadd.f32 %v1252, %v1269
      %v1292 = vadd.f32 %v1253, %v1269
      %v1293 = vadd.f32 %v1254, %v1269
      %v1294 = vadd.f32 %v1255, %v1269
      %v1295 = vadd.f32 %v1256, %v1269
      %v1296 = vadd.f32 %v1257, %v1269
      %v1297 = vadd.f32 %v1258, %v1269
      %v1298 = vadd.f32 %v1259, %v1269
      %v1299 = vadd.f32 %v1260, %v1269
      %v1300 = vadd.f32 %v1261, %v1269
      %v1301 = vadd.f32 %v1262, %v1269
      %v1302 = vadd.f32 %v1263, %v1269
      %1303 = vst.msk [vmem:[%s232] sm:$0xff] %vm233, %v1271
      %1304 = vst.msk [vmem:[%s232 + $0x8] sm:$0xff] %vm233, %v1272
      %1305 = vst.msk [vmem:[%s232 + $0x10] sm:$0xff] %vm233, %v1273
      %1306 = vst.msk [vmem:[%s232 + $0x18] sm:$0xff] %vm233, %v1274
      %1307 = vst.msk [vmem:[%s232 + $0x20] sm:$0xff] %vm233, %v1275
      %1308 = vst.msk [vmem:[%s232 + $0x28] sm:$0xff] %vm233, %v1276
      %1309 = vst.msk [vmem:[%s232 + $0x30] sm:$0xff] %vm233, %v1277
      %1310 = vst.msk [vmem:[%s232 + $0x38] sm:$0xff] %vm233, %v1278
      %1311 = vst.msk [vmem:[%s232 + $0x40] sm:$0xff] %vm233, %v1279
      %1312 = vst.msk [vmem:[%s232 + $0x48] sm:$0xff] %vm233, %v1280
      %1313 = vst.msk [vmem:[%s232 + $0x50] sm:$0xff] %vm233, %v1281
      %1314 = vst.msk [vmem:[%s232 + $0x58] sm:$0xff] %vm233, %v1282
      %1315 = vst.msk [vmem:[%s232 + $0x60] sm:$0xff] %vm233, %v1283
      %1316 = vst.msk [vmem:[%s232 + $0x68] sm:$0xff] %vm233, %v1284
      %1317 = vst.msk [vmem:[%s232 + $0x70] sm:$0xff] %vm233, %v1285
      %1318 = vst.msk [vmem:[%s232 + $0x78] sm:$0xff] %vm233, %v1286
      %1319 = vst.msk [vmem:[%s232 + $0x80] sm:$0xff] %vm233, %v1287
      %1320 = vst.msk [vmem:[%s232 + $0x88] sm:$0xff] %vm233, %v1288
      %1321 = vst.msk [vmem:[%s232 + $0x90] sm:$0xff] %vm233, %v1289
      %1322 = vst.msk [vmem:[%s232 + $0x98] sm:$0xff] %vm233, %v1290
      %1323 = vst.msk [vmem:[%s232 + $0xa0] sm:$0xff] %vm233, %v1291
      %1324 = vst.msk [vmem:[%s232 + $0xa8] sm:$0xff] %vm233, %v1292
      %1325 = vst.msk [vmem:[%s232 + $0xb0] sm:$0xff] %vm233, %v1293
      %1326 = vst.msk [vmem:[%s232 + $0xb8] sm:$0xff] %vm233, %v1294
      %1327 = vst.msk [vmem:[%s232 + $0xc0] sm:$0xff] %vm233, %v1295
      %1328 = vst.msk [vmem:[%s232 + $0xc8] sm:$0xff] %vm233, %v1296
      %1329 = vst.msk [vmem:[%s232 + $0xd0] sm:$0xff] %vm233, %v1297
      %1330 = vst.msk [vmem:[%s232 + $0xd8] sm:$0xff] %vm233, %v1298
      %1331 = vst.msk [vmem:[%s232 + $0xe0] sm:$0xff] %vm233, %v1299
      %1332 = vst.msk [vmem:[%s232 + $0xe8] sm:$0xff] %vm233, %v1300
      %1333 = vst.msk [vmem:[%s232 + $0xf0] sm:$0xff] %vm233, %v1301
      %1334 = vst.msk [vmem:[%s232 + $0xf8] sm:$0xff] %vm233, %v1302
      %p1335 = scmp.lt.s32.totalorder %s18, 1
      %s1336 = scalar_select %p1335, %s18, 1
      %p1337 = scmp.lt.s32.totalorder %s19, 0
      %s1338 = scalar_select %p1337, %s19, 0
      %s1339 = smul.addr %s1336, 32
      %s1340 = sadd.s32 %s1338, %s1339
      %s1341 = smul.addr %s1340, 8
      %s1342 = scalar_lea.vmem %s3, %s1341
      // Predicated region
      $region33: #{tpu_custom_call.1} parent=31 // pred_check
        %p1343 = pneg %p126
      $region34: #{tpu_custom_call.1} parent=31 // pred_check_branch
        %1345 = sbr.rel (%p1343) target = $region36
      $region35: #{tpu_custom_call.1} parent=31 // pred_region
        _
      $region36: #{tpu_custom_call.1} parent=31 // pred_fallthru
        _
    $region32: #{tpu_custom_call.1} parent=5 // pred_fallthru
      _
    %p1346 = scmp.le.s32.totalorder 2, %s9
    // Predicated region
    $region37: #{tpu_custom_call.1} parent=5 // pred_check
      %p1347 = pneg %p1346
    $region38: #{tpu_custom_call.1} parent=5 // pred_check_branch
      %1349 = sbr.rel (%p1347) target = $region40
    $region39: #{tpu_custom_call.1} parent=5 // pred_region
      %s1350 = ssub.s32 %s9, 2
      // Predicated region
      $region41: #{tpu_custom_call.1} parent=39 // pred_check
        %p1351 = pneg %p132
      $region42: #{tpu_custom_call.1} parent=39 // pred_check_branch
        %1353 = sbr.rel (%p1351) target = $region44
      $region43: #{tpu_custom_call.1} parent=39 // pred_region
        %p1354 = scmp.lt.s32.totalorder %s20, 1
        %s1355 = scalar_select %p1354, %s20, 1
        %p1356 = scmp.lt.s32.totalorder %s21, 0
        %s1357 = scalar_select %p1356, %s21, 0
        %s1358 = smul.addr %s1355, 32
        %s1359 = sadd.s32 %s1357, %s1358
        %s1360 = smul.addr %s1359, 8
        %s1361 = scalar_lea.vmem %s3, %s1360
      $region44: #{tpu_custom_call.1} parent=39 // pred_fallthru
        _
    $region40: #{tpu_custom_call.1} parent=5 // pred_fallthru
      _
  $region6: #{tpu_custom_call.1} parent=0 // loop_footer
    %s13 = sadd.s32 1, %s9
  $region7: #{tpu_custom_call.1} parent=0 // loop_footer_branch
    %8 = sbr.rel target = $region3
  $region8: #{tpu_custom_call.1} parent=0 // loop_exit
    _

</llo_original>
